<compile_context>
chip_gen: v7x
topology: tpu7x:2x2x1
jax: 0.10.0
libtpu: 0.0.40
codegen_flags: <defaults>
</compile_context>

<pallas_src>
import functools

import jax
import jax.numpy as jnp
from jax import lax
from jax.experimental import pallas as pl
from jax.experimental.pallas import tpu as pltpu


def _round_up(n: int, m: int) -> int:
    return ((n + m - 1) // m) * m


def nade_kernel(x_ref, w_ref, vt_ref, b_ref, c_ref, out_ref):
    # x_ref  : (Bt, D)    batch tile of the flattened input   (f32, pipelined)
    # w_ref  : (Hs, D)    W                                   (f32)
    # vt_ref : (Hs, D)    V.T                                 (f32)
    # b_ref  : (1, D)     output bias                         (f32)
    # c_ref  : (Hs, 1)    hidden bias                         (f32)
    # out_ref: (Bt, D)
    x = x_ref[...]                                    # (Bt, D)
    w = w_ref[...]                                    # (Hs, D)
    Bt, D = x.shape
    Hs = w.shape[0]

    # Q[h*Bt + b, j] = W[h, j] * x[b, j].  h-major packing keeps every Hs
    # chunk of the epilogue a contiguous, sublane-aligned row block (Bt % 8
    # == 0 is guaranteed by the wrapper, so the reshape is a layout no-op).
    q = (w[:, None, :] * x[None, :, :]).reshape(Hs * Bt, D)
    q = q.astype(jnp.bfloat16)                        # bf16 MXU operand

    # Strict upper-triangular mask U[j, d] = 1 iff j < d, generated in-kernel
    # (no HBM DMA, no resident double-buffered (D, D) operand).
    row = lax.broadcasted_iota(jnp.int32, (D, D), 0)
    col = lax.broadcasted_iota(jnp.int32, (D, D), 1)
    u = (row < col).astype(jnp.bfloat16)

    # Every exclusive prefix sum in one MXU matmul (f32 accumulation):
    #   At[m, d] = sum_{j < d} Q[m, j]
    at = jnp.dot(q, u, preferred_element_type=jnp.float32)   # (Hs*Bt, D) f32

    c = c_ref[...]                                    # (Hs, 1)
    vt = vt_ref[...]                                  # (Hs, D)

    # Fused epilogue: walk Hs in sublane-sized chunks with one (Bt, D) f32
    # accumulator; the full-size (Bt, Hs, D) temporaries never materialize.
    HC = 8
    logits = jnp.zeros((Bt, D), jnp.float32)
    for k in range(Hs // HC):
        r0 = k * HC * Bt
        a_chunk = at[r0:r0 + HC * Bt, :].reshape(HC, Bt, D)
        a_chunk = a_chunk + c[k * HC:(k + 1) * HC, :][:, :, None]   # + c[h]
        h_chunk = jax.nn.sigmoid(a_chunk)                           # EUP
        logits = logits + jnp.sum(
            h_chunk * vt[k * HC:(k + 1) * HC, None, :], axis=0)     # (Bt, D)

    out_ref[...] = jax.nn.sigmoid(logits + b_ref[...])              # (Bt, D)


@functools.partial(jax.jit, static_argnames=("input_channel", "input_height",
                                              "input_width", "batch_tile"))
def nade_forward(x, V, b, W, c, *, input_channel, input_height, input_width,
                 batch_tile=64):
    B = x.shape[0]
    D = input_channel * input_height * input_width
    Hs = c.shape[0]
    Hs_p = _round_up(Hs, 8)

    x2d = x.reshape(B, D).astype(jnp.float32)

    # --- batch tiling -------------------------------------------------------
    # Pad only to the 8-sublane minimum for tiny batches; otherwise use the
    # requested tile (MXU M = Bt*Hs in the 1K-4K range), and split a single
    # full tile in two so a v7x megacore sees >= 2 "parallel" grid steps.
    Bp8 = _round_up(B, 8)
    Bt = _round_up(min(batch_tile, Bp8), 8)
    if Bp8 > 8 and Bp8 <= Bt:
        Bt = _round_up((Bp8 + 1) // 2, 8)
    Bp = _round_up(Bp8, Bt)
    if Bp != B:
        x2d = jnp.pad(x2d, ((0, Bp - B), (0, 0)))

    # --- parameters ---------------------------------------------------------
    # Zero-pad Hs to a multiple of 8 (exact: padded W rows give a = 0, and the
    # padded V.T rows are zero so those hidden units contribute nothing).
    w_f32 = W.astype(jnp.float32)                       # (Hs, D)
    vt = jnp.transpose(V).astype(jnp.float32)           # (Hs, D)
    c_col = c.reshape(Hs, 1).astype(jnp.float32)        # (Hs, 1)
    if Hs_p != Hs:
        pad = ((0, Hs_p - Hs), (0, 0))
        w_f32 = jnp.pad(w_f32, pad)
        vt = jnp.pad(vt, pad)
        c_col = jnp.pad(c_col, pad)
    b_row = b.reshape(1, D).astype(jnp.float32)          # (1, D)

    grid = (Bp // Bt,)
    rep = lambda i: (0, 0)   # grid-invariant operands (weights / biases)

    # VMEM budget from actual block + temporary sizes (2x headroom, 8 MiB floor)
    io_bytes = 2 * (Bt * D * 4) * 2                       # x, out (double buffered)
    wgt_bytes = 2 * (2 * Hs_p * D * 4 + 8 * D * 4 + Hs_p * 128 * 4)
    q_bytes = Hs_p * Bt * D * (4 + 2)                     # f32 product + bf16 cast
    u_bytes = D * D * (4 + 4 + 2)                         # 2 iotas + bf16 mask
    at_bytes = Hs_p * Bt * D * 4
    epi_bytes = (3 * 8 + 1) * Bt * D * 4                  # one chunk + accumulator
    vmem_limit = max(
        8 << 20,
        2 * (io_bytes + wgt_bytes + q_bytes + u_bytes + at_bytes + epi_bytes)
        + (4 << 20))
    vmem_limit = min(vmem_limit, 100 << 20)

    flops = 2 * Bp * Hs_p * D * D + 8 * Bp * Hs_p * D
    transcendentals = Bp * Hs_p * D + Bp * D
    bytes_accessed = 4 * (2 * Bp * D + 2 * Hs_p * D + D + Hs_p)

    out2d = pl.pallas_call(
        nade_kernel,
        out_shape=jax.ShapeDtypeStruct((Bp, D), jnp.float32),
        grid=grid,
        in_specs=[
            pl.BlockSpec((Bt, D), lambda i: (i, 0)),   # x tile (pipelined)
            pl.BlockSpec((Hs_p, D), rep),              # W
            pl.BlockSpec((Hs_p, D), rep),              # V.T
            pl.BlockSpec((1, D), rep),                 # b
            pl.BlockSpec((Hs_p, 1), rep),              # c
        ],
        out_specs=pl.BlockSpec((Bt, D), lambda i: (i, 0)),
        compiler_params=pltpu.CompilerParams(
            dimension_semantics=("parallel",),
            vmem_limit_bytes=int(vmem_limit),
        ),
        cost_estimate=pl.CostEstimate(
            flops=int(flops),
            transcendentals=int(transcendentals),
            bytes_accessed=int(bytes_accessed),
        ),
    )(x2d, w_f32, vt, b_row, c_col)

    out2d = out2d[:B]
    return out2d.reshape(B, input_channel, input_height, input_width)


def nade_reference(x, V, b, W, c, *, input_channel, input_height, input_width):
    """Vectorized pure-JAX transcription of the sequential PyTorch loop."""
    B = x.shape[0]
    D = input_channel * input_height * input_width
    Hs = c.shape[0]
    x2 = x.reshape(B, D).astype(jnp.float32)
    contrib = x2[:, :, None] * jnp.transpose(W)[None, :, :]        # (B, D, Hs)
    incl = jnp.cumsum(contrib, axis=1)
    excl = jnp.concatenate(
        [jnp.zeros((B, 1, Hs), jnp.float32), incl[:, :-1, :]], axis=1)
    a = excl + c[None, None, :]
    h = jax.nn.sigmoid(a)                                          # (B, D, Hs)
    logits = jnp.einsum("bdh,dh->bd", h, V) + b[None, :]
    return jax.nn.sigmoid(logits).reshape(
        B, input_channel, input_height, input_width)


if __name__ == "__main__":
    # Small shapes consistent with the module.
    batch = 2
    input_channel, input_height, input_width = 4, 8, 8
    h_size = 32
    D = input_channel * input_height * input_width  # 256

    key = jax.random.PRNGKey(0)
    kx, kv, kw = jax.random.split(key, 3)

    # Deterministic parameter init (xavier_normal_ for V and W, zeros for b, c).
    std_v = (2.0 / (D + h_size)) ** 0.5
    std_w = (2.0 / (h_size + D)) ** 0.5
    V = std_v * jax.random.normal(kv, (D, h_size), dtype=jnp.float32)
    W = std_w * jax.random.normal(kw, (h_size, D), dtype=jnp.float32)
    b = jnp.zeros((D,), dtype=jnp.float32)
    c = jnp.zeros((h_size,), dtype=jnp.float32)

    x = jax.random.normal(
        kx, (batch, input_channel, input_height, input_width), dtype=jnp.float32)

    out = nade_forward(x, V, b, W, c,
                       input_channel=input_channel,
                       input_height=input_height,
                       input_width=input_width)
    out = jax.block_until_ready(out)
    assert out.shape == (batch, input_channel, input_height, input_width)

    # Correctness check against the (vectorized) sequential reference.  The
    # kernel uses bf16 MXU operands with f32 accumulation -> few e-4 of drift.
    ref = jax.jit(functools.partial(nade_reference,
                                    input_channel=input_channel,
                                    input_height=input_height,
                                    input_width=input_width))(x, V, b, W, c)
    ref = jax.block_until_ready(ref)
    max_err = float(jnp.max(jnp.abs(out - ref)))
    assert max_err < 2e-3, (
        f"Pallas NADE kernel mismatch vs reference: max|diff|={max_err}")

    print("KERNEL_OK")
</pallas_src>

<mosaic_0001>
module attributes {stable_mosaic.version = 11 : i64} {
  func.func @nade_kernel(%arg0: i32, %arg1: memref<8x256xf32, #tpu.memory_space<vmem>>, %arg2: memref<32x256xf32, #tpu.memory_space<vmem>>, %arg3: memref<32x256xf32, #tpu.memory_space<vmem>>, %arg4: memref<1x256xf32, #tpu.memory_space<vmem>>, %arg5: memref<32x1xf32, #tpu.memory_space<vmem>>, %arg6: memref<8x256xf32, #tpu.memory_space<vmem>>) attributes {dimension_semantics = [#tpu.dimension_semantics<parallel>], iteration_bounds = array<i64: 1>, scalar_prefetch = 0 : i64, scratch_operands = 0 : i64, tpu.core_type = #tpu.core_type<tc>, window_params = [{transform_indices = @transform_0, window_bounds = array<i64: 8, 256>}, {pipeline_mode = #tpu.pipeline_mode<synchronous>, transform_indices = @transform_1, window_bounds = array<i64: 32, 256>}, {pipeline_mode = #tpu.pipeline_mode<synchronous>, transform_indices = @transform_2, window_bounds = array<i64: 32, 256>}, {pipeline_mode = #tpu.pipeline_mode<synchronous>, transform_indices = @transform_3, window_bounds = array<i64: 1, 256>}, {pipeline_mode = #tpu.pipeline_mode<synchronous>, transform_indices = @transform_4, window_bounds = array<i64: 32, 1>}, {transform_indices = @transform_5, window_bounds = array<i64: 8, 256>}]} {
    %c0 = arith.constant 0 : index
    %c0_0 = arith.constant 0 : index
    %0 = vector.load %arg1[%c0, %c0_0] : memref<8x256xf32, #tpu.memory_space<vmem>>, vector<8x256xf32>
    %c0_1 = arith.constant 0 : index
    %c0_2 = arith.constant 0 : index
    %1 = vector.load %arg2[%c0_1, %c0_2] : memref<32x256xf32, #tpu.memory_space<vmem>>, vector<32x256xf32>
    %2 = vector.shape_cast %1 : vector<32x256xf32> to vector<32x1x256xf32>
    %3 = vector.shape_cast %0 : vector<8x256xf32> to vector<1x8x256xf32>
    %4 = vector.broadcast %2 : vector<32x1x256xf32> to vector<32x8x256xf32>
    %5 = vector.broadcast %3 : vector<1x8x256xf32> to vector<32x8x256xf32>
    %6 = arith.mulf %4, %5 : vector<32x8x256xf32>
    %7 = vector.shape_cast %6 : vector<32x8x256xf32> to vector<256x256xf32>
    %8 = arith.truncf %7 : vector<256x256xf32> to vector<256x256xbf16>
    %9 = tpu.iota {dimensions = array<i32: 0>} : vector<256x256xi32>
    %10 = tpu.iota {dimensions = array<i32: 1>} : vector<256x256xi32>
    %11 = arith.cmpi slt, %9, %10 : vector<256x256xi32>
    %12 = arith.extui %11 : vector<256x256xi1> to vector<256x256xi32>
    %13 = arith.sitofp %12 : vector<256x256xi32> to vector<256x256xf32>
    %14 = arith.truncf %13 : vector<256x256xf32> to vector<256x256xbf16>
    %cst = arith.constant dense<0.000000e+00> : vector<256x256xf32>
    %15 = tpu.matmul %8, %14, %cst {dimension_numbers = #tpu.dot_dimension_numbers<[1], [0], [0], [1], [0, 0, 1, 1], [], []>} : vector<256x256xbf16>, vector<256x256xbf16>, vector<256x256xf32> -> vector<256x256xf32>
    %c0_3 = arith.constant 0 : index
    %c0_4 = arith.constant 0 : index
    %16 = vector.load %arg5[%c0_3, %c0_4] : memref<32x1xf32, #tpu.memory_space<vmem>>, vector<32x1xf32>
    %c0_5 = arith.constant 0 : index
    %c0_6 = arith.constant 0 : index
    %17 = vector.load %arg3[%c0_5, %c0_6] : memref<32x256xf32, #tpu.memory_space<vmem>>, vector<32x256xf32>
    %cst_7 = arith.constant 0.000000e+00 : f32
    %18 = vector.broadcast %cst_7 : f32 to vector<8x256xf32>
    %19 = vector.extract_strided_slice %15 {offsets = [0, 0], sizes = [64, 256], strides = [1, 1]} : vector<256x256xf32> to vector<64x256xf32>
    %20 = vector.shape_cast %19 : vector<64x256xf32> to vector<8x8x256xf32>
    %21 = vector.extract_strided_slice %16 {offsets = [0, 0], sizes = [8, 1], strides = [1, 1]} : vector<32x1xf32> to vector<8x1xf32>
    %22 = vector.shape_cast %21 : vector<8x1xf32> to vector<8x1x1xf32>
    %23 = vector.broadcast %22 : vector<8x1x1xf32> to vector<8x8x256xf32>
    %24 = arith.addf %20, %23 : vector<8x8x256xf32>
    %25 = arith.negf %24 : vector<8x8x256xf32>
    %26 = math.exp %25 : vector<8x8x256xf32>
    %cst_8 = arith.constant 1.000000e+00 : f32
    %27 = vector.broadcast %cst_8 : f32 to vector<8x8x256xf32>
    %28 = arith.addf %27, %26 : vector<8x8x256xf32>
    %29 = arith.divf %27, %28 : vector<8x8x256xf32>
    %30 = vector.extract_strided_slice %17 {offsets = [0, 0], sizes = [8, 256], strides = [1, 1]} : vector<32x256xf32> to vector<8x256xf32>
    %31 = vector.shape_cast %30 : vector<8x256xf32> to vector<8x1x256xf32>
    %32 = vector.broadcast %31 : vector<8x1x256xf32> to vector<8x8x256xf32>
    %33 = arith.mulf %29, %32 : vector<8x8x256xf32>
    %cst_9 = arith.constant dense<0.000000e+00> : vector<8x256xf32>
    %34 = vector.multi_reduction <add>, %33, %cst_9 [0] : vector<8x8x256xf32> to vector<8x256xf32>
    %35 = arith.addf %18, %34 : vector<8x256xf32>
    %36 = vector.extract_strided_slice %15 {offsets = [64, 0], sizes = [64, 256], strides = [1, 1]} : vector<256x256xf32> to vector<64x256xf32>
    %37 = vector.shape_cast %36 : vector<64x256xf32> to vector<8x8x256xf32>
    %38 = vector.extract_strided_slice %16 {offsets = [8, 0], sizes = [8, 1], strides = [1, 1]} : vector<32x1xf32> to vector<8x1xf32>
    %39 = vector.shape_cast %38 : vector<8x1xf32> to vector<8x1x1xf32>
    %40 = vector.broadcast %39 : vector<8x1x1xf32> to vector<8x8x256xf32>
    %41 = arith.addf %37, %40 : vector<8x8x256xf32>
    %42 = arith.negf %41 : vector<8x8x256xf32>
    %43 = math.exp %42 : vector<8x8x256xf32>
    %cst_10 = arith.constant 1.000000e+00 : f32
    %44 = vector.broadcast %cst_10 : f32 to vector<8x8x256xf32>
    %45 = arith.addf %44, %43 : vector<8x8x256xf32>
    %46 = arith.divf %44, %45 : vector<8x8x256xf32>
    %47 = vector.extract_strided_slice %17 {offsets = [8, 0], sizes = [8, 256], strides = [1, 1]} : vector<32x256xf32> to vector<8x256xf32>
    %48 = vector.shape_cast %47 : vector<8x256xf32> to vector<8x1x256xf32>
    %49 = vector.broadcast %48 : vector<8x1x256xf32> to vector<8x8x256xf32>
    %50 = arith.mulf %46, %49 : vector<8x8x256xf32>
    %cst_11 = arith.constant dense<0.000000e+00> : vector<8x256xf32>
    %51 = vector.multi_reduction <add>, %50, %cst_11 [0] : vector<8x8x256xf32> to vector<8x256xf32>
    %52 = arith.addf %35, %51 : vector<8x256xf32>
    %53 = vector.extract_strided_slice %15 {offsets = [128, 0], sizes = [64, 256], strides = [1, 1]} : vector<256x256xf32> to vector<64x256xf32>
    %54 = vector.shape_cast %53 : vector<64x256xf32> to vector<8x8x256xf32>
    %55 = vector.extract_strided_slice %16 {offsets = [16, 0], sizes = [8, 1], strides = [1, 1]} : vector<32x1xf32> to vector<8x1xf32>
    %56 = vector.shape_cast %55 : vector<8x1xf32> to vector<8x1x1xf32>
    %57 = vector.broadcast %56 : vector<8x1x1xf32> to vector<8x8x256xf32>
    %58 = arith.addf %54, %57 : vector<8x8x256xf32>
    %59 = arith.negf %58 : vector<8x8x256xf32>
    %60 = math.exp %59 : vector<8x8x256xf32>
    %cst_12 = arith.constant 1.000000e+00 : f32
    %61 = vector.broadcast %cst_12 : f32 to vector<8x8x256xf32>
    %62 = arith.addf %61, %60 : vector<8x8x256xf32>
    %63 = arith.divf %61, %62 : vector<8x8x256xf32>
    %64 = vector.extract_strided_slice %17 {offsets = [16, 0], sizes = [8, 256], strides = [1, 1]} : vector<32x256xf32> to vector<8x256xf32>
    %65 = vector.shape_cast %64 : vector<8x256xf32> to vector<8x1x256xf32>
    %66 = vector.broadcast %65 : vector<8x1x256xf32> to vector<8x8x256xf32>
    %67 = arith.mulf %63, %66 : vector<8x8x256xf32>
    %cst_13 = arith.constant dense<0.000000e+00> : vector<8x256xf32>
    %68 = vector.multi_reduction <add>, %67, %cst_13 [0] : vector<8x8x256xf32> to vector<8x256xf32>
    %69 = arith.addf %52, %68 : vector<8x256xf32>
    %70 = vector.extract_strided_slice %15 {offsets = [192, 0], sizes = [64, 256], strides = [1, 1]} : vector<256x256xf32> to vector<64x256xf32>
    %71 = vector.shape_cast %70 : vector<64x256xf32> to vector<8x8x256xf32>
    %72 = vector.extract_strided_slice %16 {offsets = [24, 0], sizes = [8, 1], strides = [1, 1]} : vector<32x1xf32> to vector<8x1xf32>
    %73 = vector.shape_cast %72 : vector<8x1xf32> to vector<8x1x1xf32>
    %74 = vector.broadcast %73 : vector<8x1x1xf32> to vector<8x8x256xf32>
    %75 = arith.addf %71, %74 : vector<8x8x256xf32>
    %76 = arith.negf %75 : vector<8x8x256xf32>
    %77 = math.exp %76 : vector<8x8x256xf32>
    %cst_14 = arith.constant 1.000000e+00 : f32
    %78 = vector.broadcast %cst_14 : f32 to vector<8x8x256xf32>
    %79 = arith.addf %78, %77 : vector<8x8x256xf32>
    %80 = arith.divf %78, %79 : vector<8x8x256xf32>
    %81 = vector.extract_strided_slice %17 {offsets = [24, 0], sizes = [8, 256], strides = [1, 1]} : vector<32x256xf32> to vector<8x256xf32>
    %82 = vector.shape_cast %81 : vector<8x256xf32> to vector<8x1x256xf32>
    %83 = vector.broadcast %82 : vector<8x1x256xf32> to vector<8x8x256xf32>
    %84 = arith.mulf %80, %83 : vector<8x8x256xf32>
    %cst_15 = arith.constant dense<0.000000e+00> : vector<8x256xf32>
    %85 = vector.multi_reduction <add>, %84, %cst_15 [0] : vector<8x8x256xf32> to vector<8x256xf32>
    %86 = arith.addf %69, %85 : vector<8x256xf32>
    %c0_16 = arith.constant 0 : index
    %c0_17 = arith.constant 0 : index
    %87 = vector.load %arg4[%c0_16, %c0_17] : memref<1x256xf32, #tpu.memory_space<vmem>>, vector<1x256xf32>
    %88 = vector.broadcast %87 : vector<1x256xf32> to vector<8x256xf32>
    %89 = arith.addf %86, %88 : vector<8x256xf32>
    %90 = arith.negf %89 : vector<8x256xf32>
    %91 = math.exp %90 : vector<8x256xf32>
    %cst_18 = arith.constant 1.000000e+00 : f32
    %92 = vector.broadcast %cst_18 : f32 to vector<8x256xf32>
    %93 = arith.addf %92, %91 : vector<8x256xf32>
    %94 = arith.divf %92, %93 : vector<8x256xf32>
    %c0_19 = arith.constant 0 : index
    %c0_20 = arith.constant 0 : index
    %95 = vector.load %arg6[%c0_19, %c0_20] : memref<8x256xf32, #tpu.memory_space<vmem>>, vector<8x256xf32>
    tpu.vector_store %arg6[%c0_19, %c0_20], %94 {strides = array<i32>} : memref<8x256xf32, #tpu.memory_space<vmem>>, vector<8x256xf32>,
    return
  }
  func.func @transform_0(%arg0: i32) -> (i32, i32) {
    %c0_i32 = arith.constant 0 : i32
    %c0_i32_0 = arith.constant 0 : i32
    return %arg0, %c0_i32 : i32, i32
  }
  func.func @transform_1(%arg0: i32) -> (i32, i32) {
    %c0_i32 = arith.constant 0 : i32
    %c0_i32_0 = arith.constant 0 : i32
    %c0_i32_1 = arith.constant 0 : i32
    return %c0_i32, %c0_i32_0 : i32, i32
  }
  func.func @transform_2(%arg0: i32) -> (i32, i32) {
    %c0_i32 = arith.constant 0 : i32
    %c0_i32_0 = arith.constant 0 : i32
    %c0_i32_1 = arith.constant 0 : i32
    return %c0_i32, %c0_i32_0 : i32, i32
  }
  func.func @transform_3(%arg0: i32) -> (i32, i32) {
    %c0_i32 = arith.constant 0 : i32
    %c0_i32_0 = arith.constant 0 : i32
    %c0_i32_1 = arith.constant 0 : i32
    return %c0_i32, %c0_i32_0 : i32, i32
  }
  func.func @transform_4(%arg0: i32) -> (i32, i32) {
    %c0_i32 = arith.constant 0 : i32
    %c0_i32_0 = arith.constant 0 : i32
    %c0_i32_1 = arith.constant 0 : i32
    return %c0_i32, %c0_i32_0 : i32, i32
  }
  func.func @transform_5(%arg0: i32) -> (i32, i32) {
    %c0_i32 = arith.constant 0 : i32
    %c0_i32_0 = arith.constant 0 : i32
    return %arg0, %c0_i32 : i32, i32
  }
}

</mosaic_0001>

<llo_original>
// kernel: nade_forward.1
$region0: #{nade_forward.1}
  #allocation0 [shape = 'u32[]', space=smem, size = 0x4, offset = 0x4, fixed_abs, tag = 'smem constant byte address 0x4 - core index']
  #allocation1 [shape = 'u32[144,128]{1,0:T(1,128)}', space=vmem, size = 0x12000, scoped, tag = 'internal scratch']
  %s0 = inlined_call_operand.vmem [shape: f32[8,256], index: 0, kind: input, shape index: {}]
  %s1 = inlined_call_operand.vmem [shape: f32[32,256], index: 1, kind: input, shape index: {}]
  %s2 = inlined_call_operand.hbm [shape: f32[32,256], index: 2, kind: input, shape index: {}]
  %s3 = inlined_call_operand.vmem [shape: f32[1,256], index: 3, kind: input, shape index: {}]
  %s4 = inlined_call_operand.vmem [shape: f32[32,1], index: 4, kind: input, shape index: {}]
  %s5 = inlined_call_operand.vmem [shape: f32[8,256], index: 5, kind: output, shape index: {}]
  %s6 = sld [smem:[#allocation0]]
  $region34: #{nade_forward.1} parent=0
    _
  %s8 = ssub.s32 1, %s6
  %s9 = scalar_select 0, %s8, %s6
  $region1: #{nade_forward.1} parent=0
    #allocation2 [shape = 'u8[32768]{0}', space=vmem, size = 0x8000, scoped, tag = 'input window, operand 2, single buffered']
    #allocation3 [shape = 's32[1]{0}', space=sflag, size = 0x4, scoped, tag = 'scoped memory for nade_forward.1']
    %10 = vsyncpa [#allocation3], 0
    // Predicated region
    $region2: #{nade_forward.1} parent=1 // pred_check
      _
    $region3: #{nade_forward.1} parent=1 // pred_check_branch
      %12 = sbr.rel (0) target = $region5
    $region4: #{nade_forward.1} parent=1 // pred_region
      _
    $region5: #{nade_forward.1} parent=1 // pred_fallthru
      _
    // Predicated region
    $region6: #{nade_forward.1} parent=1 // pred_check
      _
    $region7: #{nade_forward.1} parent=1 // pred_check_branch
      %14 = sbr.rel (0) target = $region9
    $region8: #{nade_forward.1} parent=1 // pred_region
      _
    $region9: #{nade_forward.1} parent=1 // pred_fallthru
      _
    // Predicated region
    $region10: #{nade_forward.1} parent=1 // pred_check
      _
    $region11: #{nade_forward.1} parent=1 // pred_check_branch
      %16 = sbr.rel (0) target = $region13
    $region12: #{nade_forward.1} parent=1 // pred_region
      %s18 = ssub.s32 1024, 1024
      %19 = vsyncadd [#allocation3], %s18
      %s20 = sshll.u32 [#allocation2], 4
      %s21 = int_to_ptr.vmem [resolvable:$true] %s20
      %26 = dma.hbm_to_vmem [thread:$0]  %s2, 1024, %s21, [#allocation3], 256, 256, 16
    $region13: #{nade_forward.1} parent=1 // pred_fallthru
      _
    // Predicated region
    $region14: #{nade_forward.1} parent=1 // pred_check
      _
    $region15: #{nade_forward.1} parent=1 // pred_check_branch
      %28 = sbr.rel (0) target = $region17
    $region16: #{nade_forward.1} parent=1 // pred_region
      _
    $region17: #{nade_forward.1} parent=1 // pred_fallthru
      _
    // Predicated region
    $region18: #{nade_forward.1} parent=1 // pred_check
      _
    $region19: #{nade_forward.1} parent=1 // pred_check_branch
      %30 = sbr.rel (0) target = $region21
    $region20: #{nade_forward.1} parent=1 // pred_region
      _
    $region21: #{nade_forward.1} parent=1 // pred_fallthru
      _
    // Predicated region
    $region22: #{nade_forward.1} parent=1 // pred_check
      _
    $region23: #{nade_forward.1} parent=1 // pred_check_branch
      %32 = sbr.rel (0) target = $region25
    $region24: #{nade_forward.1} parent=1 // pred_region
      %33 = dma.done [#allocation3], 1024
    $region25: #{nade_forward.1} parent=1 // pred_fallthru
      _
    %v34 = vld [vmem:[%s0] sm:$0xff]
    %v35 = vld [vmem:[%s0 + $0x8] sm:$0xff]
    %v36 = vld [vmem:[%s1] sm:$0xff]
    %v37 = vld [vmem:[%s1 + $0x8] sm:$0xff]
    %v38 = vld [vmem:[%s1 + $0x10] sm:$0xff]
    %v39 = vld [vmem:[%s1 + $0x18] sm:$0xff]
    %v40 = vld [vmem:[%s1 + $0x20] sm:$0xff]
    %v41 = vld [vmem:[%s1 + $0x28] sm:$0xff]
    %v42 = vld [vmem:[%s1 + $0x30] sm:$0xff]
    %v43 = vld [vmem:[%s1 + $0x38] sm:$0xff]
    %v52 = vcombine.low %v36, %v37
    %v53 = vcombine.high %v36, %v37
    %v55 = vunpack.c.l.s4 1966171168
    %v56 = vunpack.c.0.s8 %v55
    %v57 = vlaneseq
    %v58 = vshrl.u32 %v57, 7
    %v59 = vsub.s32 %v56, %v58
    %v60 = vrot.slane %v52, %v59
    %v62 = vunpack.c.l.s4 1966171168
    %v63 = vunpack.c.0.s8 %v62
    %v64 = vlaneseq
    %v65 = vshrl.u32 %v64, 7
    %v66 = vsub.s32 %v63, %v65
    %v67 = vrot.slane %v53, %v66
    %v68 = vcombine.high %v60, %v60
    %v69 = vcombine.high %v67, %v67
    %v71 = vunpack.c.l.s4 1966171168
    %v72 = vunpack.c.0.s8 %v71
    %v73 = vlaneseq
    %v74 = vshrl.u32 %v73, 7
    %v75 = vsub.s32 %v72, %v74
    %v76 = vrot.slane %v60, %v75
    %v78 = vunpack.c.l.s4 1966171168
    %v79 = vunpack.c.0.s8 %v78
    %v80 = vlaneseq
    %v81 = vshrl.u32 %v80, 7
    %v82 = vsub.s32 %v79, %v81
    %v83 = vrot.slane %v67, %v82
    %v85 = vunpack.c.l.s4 1966171168
    %v86 = vunpack.c.0.s8 %v85
    %v87 = vlaneseq
    %v88 = vshrl.u32 %v87, 7
    %v89 = vsub.s32 %v86, %v88
    %v90 = vrot.slane %v68, %v89
    %v92 = vunpack.c.l.s4 1966171168
    %v93 = vunpack.c.0.s8 %v92
    %v94 = vlaneseq
    %v95 = vshrl.u32 %v94, 7
    %v96 = vsub.s32 %v93, %v95
    %v97 = vrot.slane %v69, %v96
    %v98 = vcombine.high %v76, %v76
    %v99 = vcombine.high %v83, %v83
    %v100 = vcombine.high %v90, %v90
    %v101 = vcombine.high %v97, %v97
    %v102 = vcombine.low %v38, %v39
    %v103 = vcombine.high %v38, %v39
    %v105 = vunpack.c.l.s4 1966171168
    %v106 = vunpack.c.0.s8 %v105
    %v107 = vlaneseq
    %v108 = vshrl.u32 %v107, 7
    %v109 = vsub.s32 %v106, %v108
    %v110 = vrot.slane %v102, %v109
    %v112 = vunpack.c.l.s4 1966171168
    %v113 = vunpack.c.0.s8 %v112
    %v114 = vlaneseq
    %v115 = vshrl.u32 %v114, 7
    %v116 = vsub.s32 %v113, %v115
    %v117 = vrot.slane %v103, %v116
    %v118 = vcombine.high %v110, %v110
    %v119 = vcombine.high %v117, %v117
    %v121 = vunpack.c.l.s4 1966171168
    %v122 = vunpack.c.0.s8 %v121
    %v123 = vlaneseq
    %v124 = vshrl.u32 %v123, 7
    %v125 = vsub.s32 %v122, %v124
    %v126 = vrot.slane %v110, %v125
    %v128 = vunpack.c.l.s4 1966171168
    %v129 = vunpack.c.0.s8 %v128
    %v130 = vlaneseq
    %v131 = vshrl.u32 %v130, 7
    %v132 = vsub.s32 %v129, %v131
    %v133 = vrot.slane %v117, %v132
    %v135 = vunpack.c.l.s4 1966171168
    %v136 = vunpack.c.0.s8 %v135
    %v137 = vlaneseq
    %v138 = vshrl.u32 %v137, 7
    %v139 = vsub.s32 %v136, %v138
    %v140 = vrot.slane %v118, %v139
    %v142 = vunpack.c.l.s4 1966171168
    %v143 = vunpack.c.0.s8 %v142
    %v144 = vlaneseq
    %v145 = vshrl.u32 %v144, 7
    %v146 = vsub.s32 %v143, %v145
    %v147 = vrot.slane %v119, %v146
    %v148 = vcombine.high %v126, %v126
    %v149 = vcombine.high %v133, %v133
    %v150 = vcombine.high %v140, %v140
    %v151 = vcombine.high %v147, %v147
    %v152 = vcombine.low %v40, %v41
    %v153 = vcombine.high %v40, %v41
    %v155 = vunpack.c.l.s4 1966171168
    %v156 = vunpack.c.0.s8 %v155
    %v157 = vlaneseq
    %v158 = vshrl.u32 %v157, 7
    %v159 = vsub.s32 %v156, %v158
    %v160 = vrot.slane %v152, %v159
    %v162 = vunpack.c.l.s4 1966171168
    %v163 = vunpack.c.0.s8 %v162
    %v164 = vlaneseq
    %v165 = vshrl.u32 %v164, 7
    %v166 = vsub.s32 %v163, %v165
    %v167 = vrot.slane %v153, %v166
    %v168 = vcombine.high %v160, %v160
    %v169 = vcombine.high %v167, %v167
    %v171 = vunpack.c.l.s4 1966171168
    %v172 = vunpack.c.0.s8 %v171
    %v173 = vlaneseq
    %v174 = vshrl.u32 %v173, 7
    %v175 = vsub.s32 %v172, %v174
    %v176 = vrot.slane %v160, %v175
    %v178 = vunpack.c.l.s4 1966171168
    %v179 = vunpack.c.0.s8 %v178
    %v180 = vlaneseq
    %v181 = vshrl.u32 %v180, 7
    %v182 = vsub.s32 %v179, %v181
    %v183 = vrot.slane %v167, %v182
    %v185 = vunpack.c.l.s4 1966171168
    %v186 = vunpack.c.0.s8 %v185
    %v187 = vlaneseq
    %v188 = vshrl.u32 %v187, 7
    %v189 = vsub.s32 %v186, %v188
    %v190 = vrot.slane %v168, %v189
    %v192 = vunpack.c.l.s4 1966171168
    %v193 = vunpack.c.0.s8 %v192
    %v194 = vlaneseq
    %v195 = vshrl.u32 %v194, 7
    %v196 = vsub.s32 %v193, %v195
    %v197 = vrot.slane %v169, %v196
    %v198 = vcombine.high %v176, %v176
    %v199 = vcombine.high %v183, %v183
    %v200 = vcombine.high %v190, %v190
    %v201 = vcombine.high %v197, %v197
    %v202 = vcombine.low %v42, %v43
    %v203 = vcombine.high %v42, %v43
    %v205 = vunpack.c.l.s4 1966171168
    %v206 = vunpack.c.0.s8 %v205
    %v207 = vlaneseq
    %v208 = vshrl.u32 %v207, 7
    %v209 = vsub.s32 %v206, %v208
    %v210 = vrot.slane %v202, %v209
    %v212 = vunpack.c.l.s4 1966171168
    %v213 = vunpack.c.0.s8 %v212
    %v214 = vlaneseq
    %v215 = vshrl.u32 %v214, 7
    %v216 = vsub.s32 %v213, %v215
    %v217 = vrot.slane %v203, %v216
    %v218 = vcombine.high %v210, %v210
    %v219 = vcombine.high %v217, %v217
    %v221 = vunpack.c.l.s4 1966171168
    %v222 = vunpack.c.0.s8 %v221
    %v223 = vlaneseq
    %v224 = vshrl.u32 %v223, 7
    %v225 = vsub.s32 %v222, %v224
    %v226 = vrot.slane %v210, %v225
    %v228 = vunpack.c.l.s4 1966171168
    %v229 = vunpack.c.0.s8 %v228
    %v230 = vlaneseq
    %v231 = vshrl.u32 %v230, 7
    %v232 = vsub.s32 %v229, %v231
    %v233 = vrot.slane %v217, %v232
    %v235 = vunpack.c.l.s4 1966171168
    %v236 = vunpack.c.0.s8 %v235
    %v237 = vlaneseq
    %v238 = vshrl.u32 %v237, 7
    %v239 = vsub.s32 %v236, %v238
    %v240 = vrot.slane %v218, %v239
    %v242 = vunpack.c.l.s4 1966171168
    %v243 = vunpack.c.0.s8 %v242
    %v244 = vlaneseq
    %v245 = vshrl.u32 %v244, 7
    %v246 = vsub.s32 %v243, %v245
    %v247 = vrot.slane %v219, %v246
    %v248 = vcombine.high %v226, %v226
    %v249 = vcombine.high %v233, %v233
    %v250 = vcombine.high %v240, %v240
    %v251 = vcombine.high %v247, %v247
    %v252 = vlaneseq
    %v253 = vshrl.u32 %v252, 7
    %v254 = vsub.s32 0, %v253
    %v255 = vrot.slane %v76, %v254
    %v256 = vlaneseq
    %v257 = vshrl.u32 %v256, 7
    %v258 = vsub.s32 1, %v257
    %v259 = vrot.slane %v76, %v258
    %v260 = vlaneseq
    %v261 = vshrl.u32 %v260, 7
    %v262 = vsub.s32 0, %v261
    %v263 = vrot.slane %v90, %v262
    %v264 = vlaneseq
    %v265 = vshrl.u32 %v264, 7
    %v266 = vsub.s32 1, %v265
    %v267 = vrot.slane %v90, %v266
    %v268 = vlaneseq
    %v269 = vshrl.u32 %v268, 7
    %v270 = vsub.s32 0, %v269
    %v271 = vrot.slane %v98, %v270
    %v272 = vlaneseq
    %v273 = vshrl.u32 %v272, 7
    %v274 = vsub.s32 1, %v273
    %v275 = vrot.slane %v98, %v274
    %v276 = vlaneseq
    %v277 = vshrl.u32 %v276, 7
    %v278 = vsub.s32 0, %v277
    %v279 = vrot.slane %v100, %v278
    %v280 = vlaneseq
    %v281 = vshrl.u32 %v280, 7
    %v282 = vsub.s32 1, %v281
    %v283 = vrot.slane %v100, %v282
    %v284 = vlaneseq
    %v285 = vshrl.u32 %v284, 7
    %v286 = vsub.s32 0, %v285
    %v287 = vrot.slane %v83, %v286
    %v288 = vlaneseq
    %v289 = vshrl.u32 %v288, 7
    %v290 = vsub.s32 1, %v289
    %v291 = vrot.slane %v83, %v290
    %v292 = vlaneseq
    %v293 = vshrl.u32 %v292, 7
    %v294 = vsub.s32 0, %v293
    %v295 = vrot.slane %v97, %v294
    %v296 = vlaneseq
    %v297 = vshrl.u32 %v296, 7
    %v298 = vsub.s32 1, %v297
    %v299 = vrot.slane %v97, %v298
    %v300 = vlaneseq
    %v301 = vshrl.u32 %v300, 7
    %v302 = vsub.s32 0, %v301
    %v303 = vrot.slane %v99, %v302
    %v304 = vlaneseq
    %v305 = vshrl.u32 %v304, 7
    %v306 = vsub.s32 1, %v305
    %v307 = vrot.slane %v99, %v306
    %v308 = vlaneseq
    %v309 = vshrl.u32 %v308, 7
    %v310 = vsub.s32 0, %v309
    %v311 = vrot.slane %v101, %v310
    %v312 = vlaneseq
    %v313 = vshrl.u32 %v312, 7
    %v314 = vsub.s32 1, %v313
    %v315 = vrot.slane %v101, %v314
    %v316 = vlaneseq
    %v317 = vshrl.u32 %v316, 7
    %v318 = vsub.s32 0, %v317
    %v319 = vrot.slane %v126, %v318
    %v320 = vlaneseq
    %v321 = vshrl.u32 %v320, 7
    %v322 = vsub.s32 1, %v321
    %v323 = vrot.slane %v126, %v322
    %v324 = vlaneseq
    %v325 = vshrl.u32 %v324, 7
    %v326 = vsub.s32 0, %v325
    %v327 = vrot.slane %v140, %v326
    %v328 = vlaneseq
    %v329 = vshrl.u32 %v328, 7
    %v330 = vsub.s32 1, %v329
    %v331 = vrot.slane %v140, %v330
    %v332 = vlaneseq
    %v333 = vshrl.u32 %v332, 7
    %v334 = vsub.s32 0, %v333
    %v335 = vrot.slane %v148, %v334
    %v336 = vlaneseq
    %v337 = vshrl.u32 %v336, 7
    %v338 = vsub.s32 1, %v337
    %v339 = vrot.slane %v148, %v338
    %v340 = vlaneseq
    %v341 = vshrl.u32 %v340, 7
    %v342 = vsub.s32 0, %v341
    %v343 = vrot.slane %v150, %v342
    %v344 = vlaneseq
    %v345 = vshrl.u32 %v344, 7
    %v346 = vsub.s32 1, %v345
    %v347 = vrot.slane %v150, %v346
    %v348 = vlaneseq
    %v349 = vshrl.u32 %v348, 7
    %v350 = vsub.s32 0, %v349
    %v351 = vrot.slane %v133, %v350
    %v352 = vlaneseq
    %v353 = vshrl.u32 %v352, 7
    %v354 = vsub.s32 1, %v353
    %v355 = vrot.slane %v133, %v354
    %v356 = vlaneseq
    %v357 = vshrl.u32 %v356, 7
    %v358 = vsub.s32 0, %v357
    %v359 = vrot.slane %v147, %v358
    %v360 = vlaneseq
    %v361 = vshrl.u32 %v360, 7
    %v362 = vsub.s32 1, %v361
    %v363 = vrot.slane %v147, %v362
    %v364 = vlaneseq
    %v365 = vshrl.u32 %v364, 7
    %v366 = vsub.s32 0, %v365
    %v367 = vrot.slane %v149, %v366
    %v368 = vlaneseq
    %v369 = vshrl.u32 %v368, 7
    %v370 = vsub.s32 1, %v369
    %v371 = vrot.slane %v149, %v370
    %v372 = vlaneseq
    %v373 = vshrl.u32 %v372, 7
    %v374 = vsub.s32 0, %v373
    %v375 = vrot.slane %v151, %v374
    %v376 = vlaneseq
    %v377 = vshrl.u32 %v376, 7
    %v378 = vsub.s32 1, %v377
    %v379 = vrot.slane %v151, %v378
    %v380 = vlaneseq
    %v381 = vshrl.u32 %v380, 7
    %v382 = vsub.s32 0, %v381
    %v383 = vrot.slane %v176, %v382
    %v384 = vlaneseq
    %v385 = vshrl.u32 %v384, 7
    %v386 = vsub.s32 1, %v385
    %v387 = vrot.slane %v176, %v386
    %v388 = vlaneseq
    %v389 = vshrl.u32 %v388, 7
    %v390 = vsub.s32 0, %v389
    %v391 = vrot.slane %v190, %v390
    %v392 = vlaneseq
    %v393 = vshrl.u32 %v392, 7
    %v394 = vsub.s32 1, %v393
    %v395 = vrot.slane %v190, %v394
    %v396 = vlaneseq
    %v397 = vshrl.u32 %v396, 7
    %v398 = vsub.s32 0, %v397
    %v399 = vrot.slane %v198, %v398
    %v400 = vlaneseq
    %v401 = vshrl.u32 %v400, 7
    %v402 = vsub.s32 1, %v401
    %v403 = vrot.slane %v198, %v402
    %v404 = vlaneseq
    %v405 = vshrl.u32 %v404, 7
    %v406 = vsub.s32 0, %v405
    %v407 = vrot.slane %v200, %v406
    %v408 = vlaneseq
    %v409 = vshrl.u32 %v408, 7
    %v410 = vsub.s32 1, %v409
    %v411 = vrot.slane %v200, %v410
    %v412 = vlaneseq
    %v413 = vshrl.u32 %v412, 7
    %v414 = vsub.s32 0, %v413
    %v415 = vrot.slane %v183, %v414
    %v416 = vlaneseq
    %v417 = vshrl.u32 %v416, 7
    %v418 = vsub.s32 1, %v417
    %v419 = vrot.slane %v183, %v418
    %v420 = vlaneseq
    %v421 = vshrl.u32 %v420, 7
    %v422 = vsub.s32 0, %v421
    %v423 = vrot.slane %v197, %v422
    %v424 = vlaneseq
    %v425 = vshrl.u32 %v424, 7
    %v426 = vsub.s32 1, %v425
    %v427 = vrot.slane %v197, %v426
    %v428 = vlaneseq
    %v429 = vshrl.u32 %v428, 7
    %v430 = vsub.s32 0, %v429
    %v431 = vrot.slane %v199, %v430
    %v432 = vlaneseq
    %v433 = vshrl.u32 %v432, 7
    %v434 = vsub.s32 1, %v433
    %v435 = vrot.slane %v199, %v434
    %v436 = vlaneseq
    %v437 = vshrl.u32 %v436, 7
    %v438 = vsub.s32 0, %v437
    %v439 = vrot.slane %v201, %v438
    %v440 = vlaneseq
    %v441 = vshrl.u32 %v440, 7
    %v442 = vsub.s32 1, %v441
    %v443 = vrot.slane %v201, %v442
    %v444 = vlaneseq
    %v445 = vshrl.u32 %v444, 7
    %v446 = vsub.s32 0, %v445
    %v447 = vrot.slane %v226, %v446
    %v448 = vlaneseq
    %v449 = vshrl.u32 %v448, 7
    %v450 = vsub.s32 1, %v449
    %v451 = vrot.slane %v226, %v450
    %v452 = vlaneseq
    %v453 = vshrl.u32 %v452, 7
    %v454 = vsub.s32 0, %v453
    %v455 = vrot.slane %v240, %v454
    %v456 = vlaneseq
    %v457 = vshrl.u32 %v456, 7
    %v458 = vsub.s32 1, %v457
    %v459 = vrot.slane %v240, %v458
    %v460 = vlaneseq
    %v461 = vshrl.u32 %v460, 7
    %v462 = vsub.s32 0, %v461
    %v463 = vrot.slane %v248, %v462
    %v464 = vlaneseq
    %v465 = vshrl.u32 %v464, 7
    %v466 = vsub.s32 1, %v465
    %v467 = vrot.slane %v248, %v466
    %v468 = vlaneseq
    %v469 = vshrl.u32 %v468, 7
    %v470 = vsub.s32 0, %v469
    %v471 = vrot.slane %v250, %v470
    %v472 = vlaneseq
    %v473 = vshrl.u32 %v472, 7
    %v474 = vsub.s32 1, %v473
    %v475 = vrot.slane %v250, %v474
    %v476 = vlaneseq
    %v477 = vshrl.u32 %v476, 7
    %v478 = vsub.s32 0, %v477
    %v479 = vrot.slane %v233, %v478
    %v480 = vlaneseq
    %v481 = vshrl.u32 %v480, 7
    %v482 = vsub.s32 1, %v481
    %v483 = vrot.slane %v233, %v482
    %v484 = vlaneseq
    %v485 = vshrl.u32 %v484, 7
    %v486 = vsub.s32 0, %v485
    %v487 = vrot.slane %v247, %v486
    %v488 = vlaneseq
    %v489 = vshrl.u32 %v488, 7
    %v490 = vsub.s32 1, %v489
    %v491 = vrot.slane %v247, %v490
    %v492 = vlaneseq
    %v493 = vshrl.u32 %v492, 7
    %v494 = vsub.s32 0, %v493
    %v495 = vrot.slane %v249, %v494
    %v496 = vlaneseq
    %v497 = vshrl.u32 %v496, 7
    %v498 = vsub.s32 1, %v497
    %v499 = vrot.slane %v249, %v498
    %v500 = vlaneseq
    %v501 = vshrl.u32 %v500, 7
    %v502 = vsub.s32 0, %v501
    %v503 = vrot.slane %v251, %v502
    %v504 = vlaneseq
    %v505 = vshrl.u32 %v504, 7
    %v506 = vsub.s32 1, %v505
    %v507 = vrot.slane %v251, %v506
    %v572 = vmul.f32 %v255, %v34
    %v573 = vmul.f32 %v259, %v35
    %v574 = vmul.f32 %v263, %v34
    %v575 = vmul.f32 %v267, %v35
    %v576 = vmul.f32 %v271, %v34
    %v577 = vmul.f32 %v275, %v35
    %v578 = vmul.f32 %v279, %v34
    %v579 = vmul.f32 %v283, %v35
    %v580 = vmul.f32 %v287, %v34
    %v581 = vmul.f32 %v291, %v35
    %v582 = vmul.f32 %v295, %v34
    %v583 = vmul.f32 %v299, %v35
    %v584 = vmul.f32 %v303, %v34
    %v585 = vmul.f32 %v307, %v35
    %v586 = vmul.f32 %v311, %v34
    %v587 = vmul.f32 %v315, %v35
    %v588 = vmul.f32 %v319, %v34
    %v589 = vmul.f32 %v323, %v35
    %v590 = vmul.f32 %v327, %v34
    %v591 = vmul.f32 %v331, %v35
    %v592 = vmul.f32 %v335, %v34
    %v593 = vmul.f32 %v339, %v35
    %v594 = vmul.f32 %v343, %v34
    %v595 = vmul.f32 %v347, %v35
    %v596 = vmul.f32 %v351, %v34
    %v597 = vmul.f32 %v355, %v35
    %v598 = vmul.f32 %v359, %v34
    %v599 = vmul.f32 %v363, %v35
    %v600 = vmul.f32 %v367, %v34
    %v601 = vmul.f32 %v371, %v35
    %v602 = vmul.f32 %v375, %v34
    %v603 = vmul.f32 %v379, %v35
    %v604 = vmul.f32 %v383, %v34
    %v605 = vmul.f32 %v387, %v35
    %v606 = vmul.f32 %v391, %v34
    %v607 = vmul.f32 %v395, %v35
    %v608 = vmul.f32 %v399, %v34
    %v609 = vmul.f32 %v403, %v35
    %v610 = vmul.f32 %v407, %v34
    %v611 = vmul.f32 %v411, %v35
    %v612 = vmul.f32 %v415, %v34
    %v613 = vmul.f32 %v419, %v35
    %v614 = vmul.f32 %v423, %v34
    %v615 = vmul.f32 %v427, %v35
    %v616 = vmul.f32 %v431, %v34
    %v617 = vmul.f32 %v435, %v35
    %v618 = vmul.f32 %v439, %v34
    %v619 = vmul.f32 %v443, %v35
    %v620 = vmul.f32 %v447, %v34
    %v621 = vmul.f32 %v451, %v35
    %v622 = vmul.f32 %v455, %v34
    %v623 = vmul.f32 %v459, %v35
    %v624 = vmul.f32 %v463, %v34
    %v625 = vmul.f32 %v467, %v35
    %v626 = vmul.f32 %v471, %v34
    %v627 = vmul.f32 %v475, %v35
    %v628 = vmul.f32 %v479, %v34
    %v629 = vmul.f32 %v483, %v35
    %v630 = vmul.f32 %v487, %v34
    %v631 = vmul.f32 %v491, %v35
    %v632 = vmul.f32 %v495, %v34
    %v633 = vmul.f32 %v499, %v35
    %v634 = vmul.f32 %v503, %v34
    %v635 = vmul.f32 %v507, %v35
    %v636 = vpack.c.bf16 %v574, %v572
    %v637 = vpack.c.bf16 %v575, %v573
    %v638 = vpack.c.bf16 %v578, %v576
    %v639 = vpack.c.bf16 %v579, %v577
    %v640 = vpack.c.bf16 %v582, %v580
    %v641 = vpack.c.bf16 %v583, %v581
    %v642 = vpack.c.bf16 %v586, %v584
    %v643 = vpack.c.bf16 %v587, %v585
    %v644 = vpack.c.bf16 %v590, %v588
    %v645 = vpack.c.bf16 %v591, %v589
    %v646 = vpack.c.bf16 %v594, %v592
    %v647 = vpack.c.bf16 %v595, %v593
    %v648 = vpack.c.bf16 %v598, %v596
    %v649 = vpack.c.bf16 %v599, %v597
    %v650 = vpack.c.bf16 %v602, %v600
    %v651 = vpack.c.bf16 %v603, %v601
    %v652 = vpack.c.bf16 %v606, %v604
    %v653 = vpack.c.bf16 %v607, %v605
    %v654 = vpack.c.bf16 %v610, %v608
    %v655 = vpack.c.bf16 %v611, %v609
    %v656 = vpack.c.bf16 %v614, %v612
    %v657 = vpack.c.bf16 %v615, %v613
    %v658 = vpack.c.bf16 %v618, %v616
    %v659 = vpack.c.bf16 %v619, %v617
    %v660 = vpack.c.bf16 %v622, %v620
    %v661 = vpack.c.bf16 %v623, %v621
    %v662 = vpack.c.bf16 %v626, %v624
    %v663 = vpack.c.bf16 %v627, %v625
    %v664 = vpack.c.bf16 %v630, %v628
    %v665 = vpack.c.bf16 %v631, %v629
    %v666 = vpack.c.bf16 %v634, %v632
    %v667 = vpack.c.bf16 %v635, %v633
    %v668 = vlaneseq
    %v669 = vshrl.u32 %v668, 7
    %v670 = vadd.s32 %v669, 8
    %v671 = vadd.s32 %v669, 16
    %v672 = vadd.s32 %v669, 24
    %v673 = vadd.s32 %v669, 32
    %v674 = vadd.s32 %v669, 40
    %v675 = vadd.s32 %v669, 48
    %v676 = vadd.s32 %v669, 56
    %v677 = vadd.s32 %v669, 64
    %v678 = vadd.s32 %v669, 72
    %v679 = vadd.s32 %v669, 80
    %v680 = vadd.s32 %v669, 88
    %v681 = vadd.s32 %v669, 96
    %v682 = vadd.s32 %v669, 104
    %v683 = vadd.s32 %v669, 112
    %v684 = vadd.s32 %v669, 120
    %v685 = vadd.s32 %v669, 128
    %v686 = vadd.s32 %v669, 136
    %v687 = vadd.s32 %v669, 144
    %v688 = vadd.s32 %v669, 152
    %v689 = vadd.s32 %v669, 160
    %v690 = vadd.s32 %v669, 168
    %v691 = vadd.s32 %v669, 176
    %v692 = vadd.s32 %v669, 184
    %v693 = vadd.s32 %v669, 192
    %v694 = vadd.s32 %v669, 200
    %v695 = vadd.s32 %v669, 208
    %v696 = vadd.s32 %v669, 216
    %v697 = vadd.s32 %v669, 224
    %v698 = vadd.s32 %v669, 232
    %v699 = vadd.s32 %v669, 240
    %v700 = vadd.s32 %v669, 248
    %v701 = vlaneseq
    %v702 = vand.u32 %v701, 127
    %v703 = vadd.s32 %v702, 128
    %vm704 = vcmp.lt.s32.totalorder %v669, %v702
    %vm705 = vcmp.lt.s32.totalorder %v669, %v703
    %vm706 = vcmp.lt.s32.totalorder %v670, %v702
    %vm707 = vcmp.lt.s32.totalorder %v670, %v703
    %vm708 = vcmp.lt.s32.totalorder %v671, %v702
    %vm709 = vcmp.lt.s32.totalorder %v671, %v703
    %vm710 = vcmp.lt.s32.totalorder %v672, %v702
    %vm711 = vcmp.lt.s32.totalorder %v672, %v703
    %vm712 = vcmp.lt.s32.totalorder %v673, %v702
    %vm713 = vcmp.lt.s32.totalorder %v673, %v703
    %vm714 = vcmp.lt.s32.totalorder %v674, %v702
    %vm715 = vcmp.lt.s32.totalorder %v674, %v703
    %vm716 = vcmp.lt.s32.totalorder %v675, %v702
    %vm717 = vcmp.lt.s32.totalorder %v675, %v703
    %vm718 = vcmp.lt.s32.totalorder %v676, %v702
    %vm719 = vcmp.lt.s32.totalorder %v676, %v703
    %vm720 = vcmp.lt.s32.totalorder %v677, %v702
    %vm721 = vcmp.lt.s32.totalorder %v677, %v703
    %vm722 = vcmp.lt.s32.totalorder %v678, %v702
    %vm723 = vcmp.lt.s32.totalorder %v678, %v703
    %vm724 = vcmp.lt.s32.totalorder %v679, %v702
    %vm725 = vcmp.lt.s32.totalorder %v679, %v703
    %vm726 = vcmp.lt.s32.totalorder %v680, %v702
    %vm727 = vcmp.lt.s32.totalorder %v680, %v703
    %vm728 = vcmp.lt.s32.totalorder %v681, %v702
    %vm729 = vcmp.lt.s32.totalorder %v681, %v703
    %vm730 = vcmp.lt.s32.totalorder %v682, %v702
    %vm731 = vcmp.lt.s32.totalorder %v682, %v703
    %vm732 = vcmp.lt.s32.totalorder %v683, %v702
    %vm733 = vcmp.lt.s32.totalorder %v683, %v703
    %vm734 = vcmp.lt.s32.totalorder %v684, %v702
    %vm735 = vcmp.lt.s32.totalorder %v684, %v703
    %vm736 = vcmp.lt.s32.totalorder %v685, %v702
    %vm737 = vcmp.lt.s32.totalorder %v685, %v703
    %vm738 = vcmp.lt.s32.totalorder %v686, %v702
    %vm739 = vcmp.lt.s32.totalorder %v686, %v703
    %vm740 = vcmp.lt.s32.totalorder %v687, %v702
    %vm741 = vcmp.lt.s32.totalorder %v687, %v703
    %vm742 = vcmp.lt.s32.totalorder %v688, %v702
    %vm743 = vcmp.lt.s32.totalorder %v688, %v703
    %vm744 = vcmp.lt.s32.totalorder %v689, %v702
    %vm745 = vcmp.lt.s32.totalorder %v689, %v703
    %vm746 = vcmp.lt.s32.totalorder %v690, %v702
    %vm747 = vcmp.lt.s32.totalorder %v690, %v703
    %vm748 = vcmp.lt.s32.totalorder %v691, %v702
    %vm749 = vcmp.lt.s32.totalorder %v691, %v703
    %vm750 = vcmp.lt.s32.totalorder %v692, %v702
    %vm751 = vcmp.lt.s32.totalorder %v692, %v703
    %vm752 = vcmp.lt.s32.totalorder %v693, %v702
    %vm753 = vcmp.lt.s32.totalorder %v693, %v703
    %vm754 = vcmp.lt.s32.totalorder %v694, %v702
    %vm755 = vcmp.lt.s32.totalorder %v694, %v703
    %vm756 = vcmp.lt.s32.totalorder %v695, %v702
    %vm757 = vcmp.lt.s32.totalorder %v695, %v703
    %vm758 = vcmp.lt.s32.totalorder %v696, %v702
    %vm759 = vcmp.lt.s32.totalorder %v696, %v703
    %vm760 = vcmp.lt.s32.totalorder %v697, %v702
    %vm761 = vcmp.lt.s32.totalorder %v697, %v703
    %vm762 = vcmp.lt.s32.totalorder %v698, %v702
    %vm763 = vcmp.lt.s32.totalorder %v698, %v703
    %vm764 = vcmp.lt.s32.totalorder %v699, %v702
    %vm765 = vcmp.lt.s32.totalorder %v699, %v703
    %vm766 = vcmp.lt.s32.totalorder %v700, %v702
    %vm767 = vcmp.lt.s32.totalorder %v700, %v703
    %v768 = vsel %vm704, 1, 0
    %v769 = vsel %vm705, 1, 0
    %v770 = vsel %vm706, 1, 0
    %v771 = vsel %vm707, 1, 0
    %v772 = vsel %vm708, 1, 0
    %v773 = vsel %vm709, 1, 0
    %v774 = vsel %vm710, 1, 0
    %v775 = vsel %vm711, 1, 0
    %v776 = vsel %vm712, 1, 0
    %v777 = vsel %vm713, 1, 0
    %v778 = vsel %vm714, 1, 0
    %v779 = vsel %vm715, 1, 0
    %v780 = vsel %vm716, 1, 0
    %v781 = vsel %vm717, 1, 0
    %v782 = vsel %vm718, 1, 0
    %v783 = vsel %vm719, 1, 0
    %v784 = vsel %vm720, 1, 0
    %v785 = vsel %vm721, 1, 0
    %v786 = vsel %vm722, 1, 0
    %v787 = vsel %vm723, 1, 0
    %v788 = vsel %vm724, 1, 0
    %v789 = vsel %vm725, 1, 0
    %v790 = vsel %vm726, 1, 0
    %v791 = vsel %vm727, 1, 0
    %v792 = vsel %vm728, 1, 0
    %v793 = vsel %vm729, 1, 0
    %v794 = vsel %vm730, 1, 0
    %v795 = vsel %vm731, 1, 0
    %v796 = vsel %vm732, 1, 0
    %v797 = vsel %vm733, 1, 0
    %v798 = vsel %vm734, 1, 0
    %v799 = vsel %vm735, 1, 0
    %v800 = vsel %vm736, 1, 0
    %v801 = vsel %vm737, 1, 0
    %v802 = vsel %vm738, 1, 0
    %v803 = vsel %vm739, 1, 0
    %v804 = vsel %vm740, 1, 0
    %v805 = vsel %vm741, 1, 0
    %v806 = vsel %vm742, 1, 0
    %v807 = vsel %vm743, 1, 0
    %v808 = vsel %vm744, 1, 0
    %v809 = vsel %vm745, 1, 0
    %v810 = vsel %vm746, 1, 0
    %v811 = vsel %vm747, 1, 0
    %v812 = vsel %vm748, 1, 0
    %v813 = vsel %vm749, 1, 0
    %v814 = vsel %vm750, 1, 0
    %v815 = vsel %vm751, 1, 0
    %v816 = vsel %vm752, 1, 0
    %v817 = vsel %vm753, 1, 0
    %v818 = vsel %vm754, 1, 0
    %v819 = vsel %vm755, 1, 0
    %v820 = vsel %vm756, 1, 0
    %v821 = vsel %vm757, 1, 0
    %v822 = vsel %vm758, 1, 0
    %v823 = vsel %vm759, 1, 0
    %v824 = vsel %vm760, 1, 0
    %v825 = vsel %vm761, 1, 0
    %v826 = vsel %vm762, 1, 0
    %v827 = vsel %vm763, 1, 0
    %v828 = vsel %vm764, 1, 0
    %v829 = vsel %vm765, 1, 0
    %v830 = vsel %vm766, 1, 0
    %v831 = vsel %vm767, 1, 0
    %v832 = vcvt.s32.f32 %v768
    %v833 = vcvt.s32.f32 %v769
    %v834 = vcvt.s32.f32 %v770
    %v835 = vcvt.s32.f32 %v771
    %v836 = vcvt.s32.f32 %v772
    %v837 = vcvt.s32.f32 %v773
    %v838 = vcvt.s32.f32 %v774
    %v839 = vcvt.s32.f32 %v775
    %v840 = vcvt.s32.f32 %v776
    %v841 = vcvt.s32.f32 %v777
    %v842 = vcvt.s32.f32 %v778
    %v843 = vcvt.s32.f32 %v779
    %v844 = vcvt.s32.f32 %v780
    %v845 = vcvt.s32.f32 %v781
    %v846 = vcvt.s32.f32 %v782
    %v847 = vcvt.s32.f32 %v783
    %v848 = vcvt.s32.f32 %v784
    %v849 = vcvt.s32.f32 %v785
    %v850 = vcvt.s32.f32 %v786
    %v851 = vcvt.s32.f32 %v787
    %v852 = vcvt.s32.f32 %v788
    %v853 = vcvt.s32.f32 %v789
    %v854 = vcvt.s32.f32 %v790
    %v855 = vcvt.s32.f32 %v791
    %v856 = vcvt.s32.f32 %v792
    %v857 = vcvt.s32.f32 %v793
    %v858 = vcvt.s32.f32 %v794
    %v859 = vcvt.s32.f32 %v795
    %v860 = vcvt.s32.f32 %v796
    %v861 = vcvt.s32.f32 %v797
    %v862 = vcvt.s32.f32 %v798
    %v863 = vcvt.s32.f32 %v799
    %v864 = vcvt.s32.f32 %v800
    %v865 = vcvt.s32.f32 %v801
    %v866 = vcvt.s32.f32 %v802
    %v867 = vcvt.s32.f32 %v803
    %v868 = vcvt.s32.f32 %v804
    %v869 = vcvt.s32.f32 %v805
    %v870 = vcvt.s32.f32 %v806
    %v871 = vcvt.s32.f32 %v807
    %v872 = vcvt.s32.f32 %v808
    %v873 = vcvt.s32.f32 %v809
    %v874 = vcvt.s32.f32 %v810
    %v875 = vcvt.s32.f32 %v811
    %v876 = vcvt.s32.f32 %v812
    %v877 = vcvt.s32.f32 %v813
    %v878 = vcvt.s32.f32 %v814
    %v879 = vcvt.s32.f32 %v815
    %v880 = vcvt.s32.f32 %v816
    %v881 = vcvt.s32.f32 %v817
    %v882 = vcvt.s32.f32 %v818
    %v883 = vcvt.s32.f32 %v819
    %v884 = vcvt.s32.f32 %v820
    %v885 = vcvt.s32.f32 %v821
    %v886 = vcvt.s32.f32 %v822
    %v887 = vcvt.s32.f32 %v823
    %v888 = vcvt.s32.f32 %v824
    %v889 = vcvt.s32.f32 %v825
    %v890 = vcvt.s32.f32 %v826
    %v891 = vcvt.s32.f32 %v827
    %v892 = vcvt.s32.f32 %v828
    %v893 = vcvt.s32.f32 %v829
    %v894 = vcvt.s32.f32 %v830
    %v895 = vcvt.s32.f32 %v831
    %v896 = vpack.c.bf16 %v834, %v832
    %v897 = vpack.c.bf16 %v835, %v833
    %v898 = vpack.c.bf16 %v838, %v836
    %v899 = vpack.c.bf16 %v839, %v837
    %v900 = vpack.c.bf16 %v842, %v840
    %v901 = vpack.c.bf16 %v843, %v841
    %v902 = vpack.c.bf16 %v846, %v844
    %v903 = vpack.c.bf16 %v847, %v845
    %v904 = vpack.c.bf16 %v850, %v848
    %v905 = vpack.c.bf16 %v851, %v849
    %v906 = vpack.c.bf16 %v854, %v852
    %v907 = vpack.c.bf16 %v855, %v853
    %v908 = vpack.c.bf16 %v858, %v856
    %v909 = vpack.c.bf16 %v859, %v857
    %v910 = vpack.c.bf16 %v862, %v860
    %v911 = vpack.c.bf16 %v863, %v861
    %v912 = vpack.c.bf16 %v866, %v864
    %v913 = vpack.c.bf16 %v867, %v865
    %v914 = vpack.c.bf16 %v870, %v868
    %v915 = vpack.c.bf16 %v871, %v869
    %v916 = vpack.c.bf16 %v874, %v872
    %v917 = vpack.c.bf16 %v875, %v873
    %v918 = vpack.c.bf16 %v878, %v876
    %v919 = vpack.c.bf16 %v879, %v877
    %v920 = vpack.c.bf16 %v882, %v880
    %v921 = vpack.c.bf16 %v883, %v881
    %v922 = vpack.c.bf16 %v886, %v884
    %v923 = vpack.c.bf16 %v887, %v885
    %v924 = vpack.c.bf16 %v890, %v888
    %v925 = vpack.c.bf16 %v891, %v889
    %v926 = vpack.c.bf16 %v894, %v892
    %v927 = vpack.c.bf16 %v895, %v893
    %928 = vmatprep.subr.bf16.mxu0 %v897
    %929 = vmatpush1.bf16.msra.mxu0 %v896
    %930 = vmatprep.subr.bf16.mxu0 %v899
    %931 = vmatpush1.bf16.msra.mxu0 %v898
    %932 = vmatprep.subr.bf16.mxu0 %v901
    %933 = vmatpush1.bf16.msra.mxu0 %v900
    %934 = vmatprep.subr.bf16.mxu0 %v903
    %935 = vmatpush1.bf16.msra.mxu0 %v902
    %936 = vmatprep.subr.bf16.mxu0 %v905
    %937 = vmatpush1.bf16.msra.mxu0 %v904
    %938 = vmatprep.subr.bf16.mxu0 %v907
    %939 = vmatpush1.bf16.msra.mxu0 %v906
    %940 = vmatprep.subr.bf16.mxu0 %v909
    %941 = vmatpush1.bf16.msra.mxu0 %v908
    %942 = vmatprep.subr.bf16.mxu0 %v911
    %943 = vmatpush1.bf16.msra.mxu0 %v910
    %944 = vmatprep.subr.bf16.mxu0 %v913
    %945 = vmatpush1.bf16.msra.mxu0 %v912
    %946 = vmatprep.subr.bf16.mxu0 %v915
    %947 = vmatpush1.bf16.msra.mxu0 %v914
    %948 = vmatprep.subr.bf16.mxu0 %v917
    %949 = vmatpush1.bf16.msra.mxu0 %v916
    %950 = vmatprep.subr.bf16.mxu0 %v919
    %951 = vmatpush1.bf16.msra.mxu0 %v918
    %952 = vmatprep.subr.bf16.mxu0 %v921
    %953 = vmatpush1.bf16.msra.mxu0 %v920
    %954 = vmatprep.subr.bf16.mxu0 %v923
    %955 = vmatpush1.bf16.msra.mxu0 %v922
    %956 = vmatprep.subr.bf16.mxu0 %v925
    %957 = vmatpush1.bf16.msra.mxu0 %v924
    %958 = vmatprep.subr.bf16.mxu0 %v927
    %959 = vmatpush1.bf16.msra.mxu0 %v926
    %960 = vmatprep.mubr.bf16.mxu0 %v637
    %961 = vmatmul.mubr.bf16.gmra.mrb[0].mxu0 %v636
    %v962 = vpop.f32.mrb[0].mxu0
    %v963 = vadd.f32 0.0, %v962
    %v964 = vpop.f32.mrb[0].mxu0
    %v965 = vadd.f32 0.0, %v964
    %v966 = vpop.f32.mrb[0].mxu0
    %v967 = vadd.f32 0.0, %v966
    %v968 = vpop.f32.mrb[0].mxu0
    %v969 = vadd.f32 0.0, %v968
    %970 = vmatprep.mubr.bf16.mxu0 %v639
    %971 = vmatmul.mubr.bf16.gmra.mrb[0].mxu0 %v638
    %v972 = vpop.f32.mrb[0].mxu0
    %v973 = vadd.f32 0.0, %v972
    %v974 = vpop.f32.mrb[0].mxu0
    %v975 = vadd.f32 0.0, %v974
    %v976 = vpop.f32.mrb[0].mxu0
    %v977 = vadd.f32 0.0, %v976
    %v978 = vpop.f32.mrb[0].mxu0
    %v979 = vadd.f32 0.0, %v978
    %980 = vmatprep.mubr.bf16.mxu0 %v641
    %981 = vmatmul.mubr.bf16.gmra.mrb[0].mxu0 %v640
    %v982 = vpop.f32.mrb[0].mxu0
    %v983 = vadd.f32 0.0, %v982
    %v984 = vpop.f32.mrb[0].mxu0
    %v985 = vadd.f32 0.0, %v984
    %v986 = vpop.f32.mrb[0].mxu0
    %v987 = vadd.f32 0.0, %v986
    %v988 = vpop.f32.mrb[0].mxu0
    %v989 = vadd.f32 0.0, %v988
    %990 = vmatprep.mubr.bf16.mxu0 %v643
    %991 = vmatmul.mubr.bf16.gmra.mrb[0].mxu0 %v642
    %v992 = vpop.f32.mrb[0].mxu0
    %v993 = vadd.f32 0.0, %v992
    %v994 = vpop.f32.mrb[0].mxu0
    %v995 = vadd.f32 0.0, %v994
    %v996 = vpop.f32.mrb[0].mxu0
    %v997 = vadd.f32 0.0, %v996
    %v998 = vpop.f32.mrb[0].mxu0
    %v999 = vadd.f32 0.0, %v998
    %1000 = vmatprep.mubr.bf16.mxu0 %v645
    %1001 = vmatmul.mubr.bf16.gmra.mrb[0].mxu0 %v644
    %v1002 = vpop.f32.mrb[0].mxu0
    %v1003 = vadd.f32 0.0, %v1002
    %v1004 = vpop.f32.mrb[0].mxu0
    %v1005 = vadd.f32 0.0, %v1004
    %v1006 = vpop.f32.mrb[0].mxu0
    %v1007 = vadd.f32 0.0, %v1006
    %v1008 = vpop.f32.mrb[0].mxu0
    %v1009 = vadd.f32 0.0, %v1008
    %1010 = vmatprep.mubr.bf16.mxu0 %v647
    %1011 = vmatmul.mubr.bf16.gmra.mrb[0].mxu0 %v646
    %v1012 = vpop.f32.mrb[0].mxu0
    %v1013 = vadd.f32 0.0, %v1012
    %v1014 = vpop.f32.mrb[0].mxu0
    %v1015 = vadd.f32 0.0, %v1014
    %v1016 = vpop.f32.mrb[0].mxu0
    %v1017 = vadd.f32 0.0, %v1016
    %v1018 = vpop.f32.mrb[0].mxu0
    %v1019 = vadd.f32 0.0, %v1018
    %1020 = vmatprep.mubr.bf16.mxu0 %v649
    %1021 = vmatmul.mubr.bf16.gmra.mrb[0].mxu0 %v648
    %v1022 = vpop.f32.mrb[0].mxu0
    %v1023 = vadd.f32 0.0, %v1022
    %v1024 = vpop.f32.mrb[0].mxu0
    %v1025 = vadd.f32 0.0, %v1024
    %v1026 = vpop.f32.mrb[0].mxu0
    %v1027 = vadd.f32 0.0, %v1026
    %v1028 = vpop.f32.mrb[0].mxu0
    %v1029 = vadd.f32 0.0, %v1028
    %1030 = vmatprep.mubr.bf16.mxu0 %v651
    %1031 = vmatmul.mubr.bf16.gmra.mrb[0].mxu0 %v650
    %v1032 = vpop.f32.mrb[0].mxu0
    %v1033 = vadd.f32 0.0, %v1032
    %v1034 = vpop.f32.mrb[0].mxu0
    %v1035 = vadd.f32 0.0, %v1034
    %v1036 = vpop.f32.mrb[0].mxu0
    %v1037 = vadd.f32 0.0, %v1036
    %v1038 = vpop.f32.mrb[0].mxu0
    %v1039 = vadd.f32 0.0, %v1038
    %1040 = vmatprep.mubr.bf16.mxu0 %v653
    %1041 = vmatmul.mubr.bf16.gmra.mrb[0].mxu0 %v652
    %v1042 = vpop.f32.mrb[0].mxu0
    %v1043 = vadd.f32 0.0, %v1042
    %v1044 = vpop.f32.mrb[0].mxu0
    %v1045 = vadd.f32 0.0, %v1044
    %v1046 = vpop.f32.mrb[0].mxu0
    %v1047 = vadd.f32 0.0, %v1046
    %v1048 = vpop.f32.mrb[0].mxu0
    %v1049 = vadd.f32 0.0, %v1048
    %1050 = vmatprep.mubr.bf16.mxu0 %v655
    %1051 = vmatmul.mubr.bf16.gmra.mrb[0].mxu0 %v654
    %v1052 = vpop.f32.mrb[0].mxu0
    %v1053 = vadd.f32 0.0, %v1052
    %v1054 = vpop.f32.mrb[0].mxu0
    %v1055 = vadd.f32 0.0, %v1054
    %v1056 = vpop.f32.mrb[0].mxu0
    %v1057 = vadd.f32 0.0, %v1056
    %v1058 = vpop.f32.mrb[0].mxu0
    %v1059 = vadd.f32 0.0, %v1058
    %1060 = vmatprep.mubr.bf16.mxu0 %v657
    %1061 = vmatmul.mubr.bf16.gmra.mrb[0].mxu0 %v656
    %v1062 = vpop.f32.mrb[0].mxu0
    %v1063 = vadd.f32 0.0, %v1062
    %v1064 = vpop.f32.mrb[0].mxu0
    %v1065 = vadd.f32 0.0, %v1064
    %v1066 = vpop.f32.mrb[0].mxu0
    %v1067 = vadd.f32 0.0, %v1066
    %v1068 = vpop.f32.mrb[0].mxu0
    %v1069 = vadd.f32 0.0, %v1068
    %1070 = vmatprep.mubr.bf16.mxu0 %v659
    %1071 = vmatmul.mubr.bf16.gmra.mrb[0].mxu0 %v658
    %v1072 = vpop.f32.mrb[0].mxu0
    %v1073 = vadd.f32 0.0, %v1072
    %v1074 = vpop.f32.mrb[0].mxu0
    %v1075 = vadd.f32 0.0, %v1074
    %v1076 = vpop.f32.mrb[0].mxu0
    %v1077 = vadd.f32 0.0, %v1076
    %v1078 = vpop.f32.mrb[0].mxu0
    %v1079 = vadd.f32 0.0, %v1078
    %1080 = vmatprep.mubr.bf16.mxu0 %v661
    %1081 = vmatmul.mubr.bf16.gmra.mrb[0].mxu0 %v660
    %v1082 = vpop.f32.mrb[0].mxu0
    %v1083 = vadd.f32 0.0, %v1082
    %v1084 = vpop.f32.mrb[0].mxu0
    %v1085 = vadd.f32 0.0, %v1084
    %v1086 = vpop.f32.mrb[0].mxu0
    %v1087 = vadd.f32 0.0, %v1086
    %v1088 = vpop.f32.mrb[0].mxu0
    %v1089 = vadd.f32 0.0, %v1088
    %1090 = vmatprep.mubr.bf16.mxu0 %v663
    %1091 = vmatmul.mubr.bf16.gmra.mrb[0].mxu0 %v662
    %v1092 = vpop.f32.mrb[0].mxu0
    %v1093 = vadd.f32 0.0, %v1092
    %v1094 = vpop.f32.mrb[0].mxu0
    %v1095 = vadd.f32 0.0, %v1094
    %v1096 = vpop.f32.mrb[0].mxu0
    %v1097 = vadd.f32 0.0, %v1096
    %v1098 = vpop.f32.mrb[0].mxu0
    %v1099 = vadd.f32 0.0, %v1098
    %1100 = vmatprep.mubr.bf16.mxu0 %v665
    %1101 = vmatmul.mubr.bf16.gmra.mrb[0].mxu0 %v664
    %v1102 = vpop.f32.mrb[0].mxu0
    %v1103 = vadd.f32 0.0, %v1102
    %v1104 = vpop.f32.mrb[0].mxu0
    %v1105 = vadd.f32 0.0, %v1104
    %v1106 = vpop.f32.mrb[0].mxu0
    %v1107 = vadd.f32 0.0, %v1106
    %v1108 = vpop.f32.mrb[0].mxu0
    %v1109 = vadd.f32 0.0, %v1108
    %1110 = vmatprep.mubr.bf16.mxu0 %v667
    %1111 = vmatmul.mubr.bf16.gmra.mrb[0].mxu0 %v666
    %v1112 = vpop.f32.mrb[0].mxu0
    %v1113 = vadd.f32 0.0, %v1112
    %v1114 = vpop.f32.mrb[0].mxu0
    %v1115 = vadd.f32 0.0, %v1114
    %v1116 = vpop.f32.mrb[0].mxu0
    %v1117 = vadd.f32 0.0, %v1116
    %v1118 = vpop.f32.mrb[0].mxu0
    %v1119 = vadd.f32 0.0, %v1118
    %1120 = vdwg.mxu0
    %v1121 = vld [vmem:[%s4] sm:$0xff]
    %v1122 = vld [vmem:[%s4 + $0x8] sm:$0xff]
    %v1123 = vld [vmem:[%s4 + $0x10] sm:$0xff]
    %v1124 = vld [vmem:[%s4 + $0x18] sm:$0xff]
    %v1125 = vld [vmem:[#allocation2] sm:$0xff]
    %v1126 = vld [vmem:[#allocation2 + $0x8] sm:$0xff]
    %v1127 = vld [vmem:[#allocation2 + $0x10] sm:$0xff]
    %v1128 = vld [vmem:[#allocation2 + $0x18] sm:$0xff]
    %v1129 = vld [vmem:[#allocation2 + $0x20] sm:$0xff]
    %v1130 = vld [vmem:[#allocation2 + $0x28] sm:$0xff]
    %v1131 = vld [vmem:[#allocation2 + $0x30] sm:$0xff]
    %v1132 = vld [vmem:[#allocation2 + $0x38] sm:$0xff]
    %v1134 = vcombine.high %v1121, %v1121
    %v1136 = vunpack.c.l.s4 1966171168
    %v1137 = vunpack.c.0.s8 %v1136
    %v1138 = vlaneseq
    %v1139 = vshrl.u32 %v1138, 7
    %v1140 = vsub.s32 %v1137, %v1139
    %v1141 = vrot.slane %v1121, %v1140
    %v1143 = vunpack.c.l.s4 1966171168
    %v1144 = vunpack.c.0.s8 %v1143
    %v1145 = vlaneseq
    %v1146 = vshrl.u32 %v1145, 7
    %v1147 = vsub.s32 %v1144, %v1146
    %v1148 = vrot.slane %v1134, %v1147
    %v1149 = vcombine.high %v1141, %v1141
    %v1150 = vcombine.high %v1148, %v1148
    %v1152 = vunpack.c.l.s4 1966171168
    %v1153 = vunpack.c.0.s8 %v1152
    %v1154 = vlaneseq
    %v1155 = vshrl.u32 %v1154, 7
    %v1156 = vsub.s32 %v1153, %v1155
    %v1157 = vrot.slane %v1141, %v1156
    %v1159 = vunpack.c.l.s4 1966171168
    %v1160 = vunpack.c.0.s8 %v1159
    %v1161 = vlaneseq
    %v1162 = vshrl.u32 %v1161, 7
    %v1163 = vsub.s32 %v1160, %v1162
    %v1164 = vrot.slane %v1148, %v1163
    %v1166 = vunpack.c.l.s4 1966171168
    %v1167 = vunpack.c.0.s8 %v1166
    %v1168 = vlaneseq
    %v1169 = vshrl.u32 %v1168, 7
    %v1170 = vsub.s32 %v1167, %v1169
    %v1171 = vrot.slane %v1149, %v1170
    %v1173 = vunpack.c.l.s4 1966171168
    %v1174 = vunpack.c.0.s8 %v1173
    %v1175 = vlaneseq
    %v1176 = vshrl.u32 %v1175, 7
    %v1177 = vsub.s32 %v1174, %v1176
    %v1178 = vrot.slane %v1150, %v1177
    %v1179 = vcombine.high %v1157, %v1157
    %v1180 = vcombine.high %v1164, %v1164
    %v1181 = vcombine.high %v1171, %v1171
    %v1182 = vcombine.high %v1178, %v1178
    %v1183 = vlaneseq
    %v1184 = vshrl.u32 %v1183, 7
    %v1185 = vsub.s32 0, %v1184
    %v1186 = vrot.slane %v1157, %v1185
    %v1187 = vlaneseq
    %v1188 = vshrl.u32 %v1187, 7
    %v1189 = vsub.s32 0, %v1188
    %v1190 = vrot.slane %v1171, %v1189
    %v1191 = vlaneseq
    %v1192 = vshrl.u32 %v1191, 7
    %v1193 = vsub.s32 0, %v1192
    %v1194 = vrot.slane %v1179, %v1193
    %v1195 = vlaneseq
    %v1196 = vshrl.u32 %v1195, 7
    %v1197 = vsub.s32 0, %v1196
    %v1198 = vrot.slane %v1181, %v1197
    %v1199 = vlaneseq
    %v1200 = vshrl.u32 %v1199, 7
    %v1201 = vsub.s32 0, %v1200
    %v1202 = vrot.slane %v1164, %v1201
    %v1203 = vlaneseq
    %v1204 = vshrl.u32 %v1203, 7
    %v1205 = vsub.s32 0, %v1204
    %v1206 = vrot.slane %v1178, %v1205
    %v1207 = vlaneseq
    %v1208 = vshrl.u32 %v1207, 7
    %v1209 = vsub.s32 0, %v1208
    %v1210 = vrot.slane %v1180, %v1209
    %v1211 = vlaneseq
    %v1212 = vshrl.u32 %v1211, 7
    %v1213 = vsub.s32 0, %v1212
    %v1214 = vrot.slane %v1182, %v1213
    %1215 = vset.pattern.permute.xlu0 0
    %1216 = vperm.xlu0 %1215, %v1186
    %v1217 = vpop.permute.xlu0 %1216
    %1219 = vset.pattern.permute.xlu0 0
    %1220 = vperm.xlu0 %1219, %v1190
    %v1221 = vpop.permute.xlu0 %1220
    %1223 = vset.pattern.permute.xlu0 0
    %1224 = vperm.xlu0 %1223, %v1194
    %v1225 = vpop.permute.xlu0 %1224
    %1227 = vset.pattern.permute.xlu0 0
    %1228 = vperm.xlu0 %1227, %v1198
    %v1229 = vpop.permute.xlu0 %1228
    %1231 = vset.pattern.permute.xlu0 0
    %1232 = vperm.xlu0 %1231, %v1202
    %v1233 = vpop.permute.xlu0 %1232
    %1235 = vset.pattern.permute.xlu0 0
    %1236 = vperm.xlu0 %1235, %v1206
    %v1237 = vpop.permute.xlu0 %1236
    %1239 = vset.pattern.permute.xlu0 0
    %1240 = vperm.xlu0 %1239, %v1210
    %v1241 = vpop.permute.xlu0 %1240
    %1243 = vset.pattern.permute.xlu0 0
    %1244 = vperm.xlu0 %1243, %v1214
    %v1245 = vpop.permute.xlu0 %1244
    %v1247 = vadd.f32 %v963, %v1217
    %v1248 = vadd.f32 %v965, %v1217
    %v1249 = vadd.f32 %v967, %v1221
    %v1250 = vadd.f32 %v969, %v1221
    %v1251 = vadd.f32 %v973, %v1225
    %v1252 = vadd.f32 %v975, %v1225
    %v1253 = vadd.f32 %v977, %v1229
    %v1254 = vadd.f32 %v979, %v1229
    %v1255 = vadd.f32 %v983, %v1233
    %v1256 = vadd.f32 %v985, %v1233
    %v1257 = vadd.f32 %v987, %v1237
    %v1258 = vadd.f32 %v989, %v1237
    %v1259 = vadd.f32 %v993, %v1241
    %v1260 = vadd.f32 %v995, %v1241
    %v1261 = vadd.f32 %v997, %v1245
    %v1262 = vadd.f32 %v999, %v1245
    %v1263 = vxor.u32 %v1247, 2147483648
    %v1264 = vxor.u32 %v1248, 2147483648
    %v1265 = vxor.u32 %v1249, 2147483648
    %v1266 = vxor.u32 %v1250, 2147483648
    %v1267 = vxor.u32 %v1251, 2147483648
    %v1268 = vxor.u32 %v1252, 2147483648
    %v1269 = vxor.u32 %v1253, 2147483648
    %v1270 = vxor.u32 %v1254, 2147483648
    %v1271 = vxor.u32 %v1255, 2147483648
    %v1272 = vxor.u32 %v1256, 2147483648
    %v1273 = vxor.u32 %v1257, 2147483648
    %v1274 = vxor.u32 %v1258, 2147483648
    %v1275 = vxor.u32 %v1259, 2147483648
    %v1276 = vxor.u32 %v1260, 2147483648
    %v1277 = vxor.u32 %v1261, 2147483648
    %v1278 = vxor.u32 %v1262, 2147483648
    %v1279 = vmul.f32 %v1263, 1.442695
    %v1280 = vpow.pop %v1279
    %v1281 = vmul.f32 %v1264, 1.442695
    %v1282 = vpow.pop %v1281
    %v1283 = vmul.f32 %v1265, 1.442695
    %v1284 = vpow.pop %v1283
    %v1285 = vmul.f32 %v1266, 1.442695
    %v1286 = vpow.pop %v1285
    %v1287 = vmul.f32 %v1267, 1.442695
    %v1288 = vpow.pop %v1287
    %v1289 = vmul.f32 %v1268, 1.442695
    %v1290 = vpow.pop %v1289
    %v1291 = vmul.f32 %v1269, 1.442695
    %v1292 = vpow.pop %v1291
    %v1293 = vmul.f32 %v1270, 1.442695
    %v1294 = vpow.pop %v1293
    %v1295 = vmul.f32 %v1271, 1.442695
    %v1296 = vpow.pop %v1295
    %v1297 = vmul.f32 %v1272, 1.442695
    %v1298 = vpow.pop %v1297
    %v1299 = vmul.f32 %v1273, 1.442695
    %v1300 = vpow.pop %v1299
    %v1301 = vmul.f32 %v1274, 1.442695
    %v1302 = vpow.pop %v1301
    %v1303 = vmul.f32 %v1275, 1.442695
    %v1304 = vpow.pop %v1303
    %v1305 = vmul.f32 %v1276, 1.442695
    %v1306 = vpow.pop %v1305
    %v1307 = vmul.f32 %v1277, 1.442695
    %v1308 = vpow.pop %v1307
    %v1309 = vmul.f32 %v1278, 1.442695
    %v1310 = vpow.pop %v1309
    %v1311 = vadd.f32 %v1280, 1.0
    %v1312 = vadd.f32 %v1282, 1.0
    %v1313 = vadd.f32 %v1284, 1.0
    %v1314 = vadd.f32 %v1286, 1.0
    %v1315 = vadd.f32 %v1288, 1.0
    %v1316 = vadd.f32 %v1290, 1.0
    %v1317 = vadd.f32 %v1292, 1.0
    %v1318 = vadd.f32 %v1294, 1.0
    %v1319 = vadd.f32 %v1296, 1.0
    %v1320 = vadd.f32 %v1298, 1.0
    %v1321 = vadd.f32 %v1300, 1.0
    %v1322 = vadd.f32 %v1302, 1.0
    %v1323 = vadd.f32 %v1304, 1.0
    %v1324 = vadd.f32 %v1306, 1.0
    %v1325 = vadd.f32 %v1308, 1.0
    %v1326 = vadd.f32 %v1310, 1.0
    %v1327 = vrcp.pop %v1311
    %v1328 = vmul.f32 1.0, %v1327
    %v1329 = vrcp.pop %v1312
    %v1330 = vmul.f32 1.0, %v1329
    %v1331 = vrcp.pop %v1313
    %v1332 = vmul.f32 1.0, %v1331
    %v1333 = vrcp.pop %v1314
    %v1334 = vmul.f32 1.0, %v1333
    %v1335 = vrcp.pop %v1315
    %v1336 = vmul.f32 1.0, %v1335
    %v1337 = vrcp.pop %v1316
    %v1338 = vmul.f32 1.0, %v1337
    %v1339 = vrcp.pop %v1317
    %v1340 = vmul.f32 1.0, %v1339
    %v1341 = vrcp.pop %v1318
    %v1342 = vmul.f32 1.0, %v1341
    %v1343 = vrcp.pop %v1319
    %v1344 = vmul.f32 1.0, %v1343
    %v1345 = vrcp.pop %v1320
    %v1346 = vmul.f32 1.0, %v1345
    %v1347 = vrcp.pop %v1321
    %v1348 = vmul.f32 1.0, %v1347
    %v1349 = vrcp.pop %v1322
    %v1350 = vmul.f32 1.0, %v1349
    %v1351 = vrcp.pop %v1323
    %v1352 = vmul.f32 1.0, %v1351
    %v1353 = vrcp.pop %v1324
    %v1354 = vmul.f32 1.0, %v1353
    %v1355 = vrcp.pop %v1325
    %v1356 = vmul.f32 1.0, %v1355
    %v1357 = vrcp.pop %v1326
    %v1358 = vmul.f32 1.0, %v1357
    %v1361 = vcombine.low %v1125, %v1126
    %v1362 = vcombine.high %v1125, %v1126
    %v1364 = vunpack.c.l.s4 1966171168
    %v1365 = vunpack.c.0.s8 %v1364
    %v1366 = vlaneseq
    %v1367 = vshrl.u32 %v1366, 7
    %v1368 = vsub.s32 %v1365, %v1367
    %v1369 = vrot.slane %v1361, %v1368
    %v1371 = vunpack.c.l.s4 1966171168
    %v1372 = vunpack.c.0.s8 %v1371
    %v1373 = vlaneseq
    %v1374 = vshrl.u32 %v1373, 7
    %v1375 = vsub.s32 %v1372, %v1374
    %v1376 = vrot.slane %v1362, %v1375
    %v1377 = vcombine.high %v1369, %v1369
    %v1378 = vcombine.high %v1376, %v1376
    %v1380 = vunpack.c.l.s4 1966171168
    %v1381 = vunpack.c.0.s8 %v1380
    %v1382 = vlaneseq
    %v1383 = vshrl.u32 %v1382, 7
    %v1384 = vsub.s32 %v1381, %v1383
    %v1385 = vrot.slane %v1369, %v1384
    %v1387 = vunpack.c.l.s4 1966171168
    %v1388 = vunpack.c.0.s8 %v1387
    %v1389 = vlaneseq
    %v1390 = vshrl.u32 %v1389, 7
    %v1391 = vsub.s32 %v1388, %v1390
    %v1392 = vrot.slane %v1376, %v1391
    %v1394 = vunpack.c.l.s4 1966171168
    %v1395 = vunpack.c.0.s8 %v1394
    %v1396 = vlaneseq
    %v1397 = vshrl.u32 %v1396, 7
    %v1398 = vsub.s32 %v1395, %v1397
    %v1399 = vrot.slane %v1377, %v1398
    %v1401 = vunpack.c.l.s4 1966171168
    %v1402 = vunpack.c.0.s8 %v1401
    %v1403 = vlaneseq
    %v1404 = vshrl.u32 %v1403, 7
    %v1405 = vsub.s32 %v1402, %v1404
    %v1406 = vrot.slane %v1378, %v1405
    %v1407 = vcombine.high %v1385, %v1385
    %v1408 = vcombine.high %v1392, %v1392
    %v1409 = vcombine.high %v1399, %v1399
    %v1410 = vcombine.high %v1406, %v1406
    %v1411 = vlaneseq
    %v1412 = vshrl.u32 %v1411, 7
    %v1413 = vsub.s32 0, %v1412
    %v1414 = vrot.slane %v1385, %v1413
    %v1415 = vlaneseq
    %v1416 = vshrl.u32 %v1415, 7
    %v1417 = vsub.s32 1, %v1416
    %v1418 = vrot.slane %v1385, %v1417
    %v1419 = vlaneseq
    %v1420 = vshrl.u32 %v1419, 7
    %v1421 = vsub.s32 0, %v1420
    %v1422 = vrot.slane %v1399, %v1421
    %v1423 = vlaneseq
    %v1424 = vshrl.u32 %v1423, 7
    %v1425 = vsub.s32 1, %v1424
    %v1426 = vrot.slane %v1399, %v1425
    %v1427 = vlaneseq
    %v1428 = vshrl.u32 %v1427, 7
    %v1429 = vsub.s32 0, %v1428
    %v1430 = vrot.slane %v1407, %v1429
    %v1431 = vlaneseq
    %v1432 = vshrl.u32 %v1431, 7
    %v1433 = vsub.s32 1, %v1432
    %v1434 = vrot.slane %v1407, %v1433
    %v1435 = vlaneseq
    %v1436 = vshrl.u32 %v1435, 7
    %v1437 = vsub.s32 0, %v1436
    %v1438 = vrot.slane %v1409, %v1437
    %v1439 = vlaneseq
    %v1440 = vshrl.u32 %v1439, 7
    %v1441 = vsub.s32 1, %v1440
    %v1442 = vrot.slane %v1409, %v1441
    %v1443 = vlaneseq
    %v1444 = vshrl.u32 %v1443, 7
    %v1445 = vsub.s32 0, %v1444
    %v1446 = vrot.slane %v1392, %v1445
    %v1447 = vlaneseq
    %v1448 = vshrl.u32 %v1447, 7
    %v1449 = vsub.s32 1, %v1448
    %v1450 = vrot.slane %v1392, %v1449
    %v1451 = vlaneseq
    %v1452 = vshrl.u32 %v1451, 7
    %v1453 = vsub.s32 0, %v1452
    %v1454 = vrot.slane %v1406, %v1453
    %v1455 = vlaneseq
    %v1456 = vshrl.u32 %v1455, 7
    %v1457 = vsub.s32 1, %v1456
    %v1458 = vrot.slane %v1406, %v1457
    %v1459 = vlaneseq
    %v1460 = vshrl.u32 %v1459, 7
    %v1461 = vsub.s32 0, %v1460
    %v1462 = vrot.slane %v1408, %v1461
    %v1463 = vlaneseq
    %v1464 = vshrl.u32 %v1463, 7
    %v1465 = vsub.s32 1, %v1464
    %v1466 = vrot.slane %v1408, %v1465
    %v1467 = vlaneseq
    %v1468 = vshrl.u32 %v1467, 7
    %v1469 = vsub.s32 0, %v1468
    %v1470 = vrot.slane %v1410, %v1469
    %v1471 = vlaneseq
    %v1472 = vshrl.u32 %v1471, 7
    %v1473 = vsub.s32 1, %v1472
    %v1474 = vrot.slane %v1410, %v1473
    %v1491 = vmul.f32 %v1328, %v1414
    %v1492 = vmul.f32 %v1330, %v1418
    %v1493 = vmul.f32 %v1332, %v1422
    %v1494 = vmul.f32 %v1334, %v1426
    %v1495 = vmul.f32 %v1336, %v1430
    %v1496 = vmul.f32 %v1338, %v1434
    %v1497 = vmul.f32 %v1340, %v1438
    %v1498 = vmul.f32 %v1342, %v1442
    %v1499 = vmul.f32 %v1344, %v1446
    %v1500 = vmul.f32 %v1346, %v1450
    %v1501 = vmul.f32 %v1348, %v1454
    %v1502 = vmul.f32 %v1350, %v1458
    %v1503 = vmul.f32 %v1352, %v1462
    %v1504 = vmul.f32 %v1354, %v1466
    %v1505 = vmul.f32 %v1356, %v1470
    %v1506 = vmul.f32 %v1358, %v1474
    %v1507 = vadd.f32 %v1491, %v1493
    %v1508 = vadd.f32 %v1507, %v1495
    %v1509 = vadd.f32 %v1508, %v1497
    %v1510 = vadd.f32 %v1509, %v1499
    %v1511 = vadd.f32 %v1510, %v1501
    %v1512 = vadd.f32 %v1511, %v1503
    %v1513 = vadd.f32 %v1512, %v1505
    %v1514 = vadd.f32 %v1492, %v1494
    %v1515 = vadd.f32 %v1514, %v1496
    %v1516 = vadd.f32 %v1515, %v1498
    %v1517 = vadd.f32 %v1516, %v1500
    %v1518 = vadd.f32 %v1517, %v1502
    %v1519 = vadd.f32 %v1518, %v1504
    %v1520 = vadd.f32 %v1519, %v1506
    %v1521 = vadd.f32 %v1513, 0.0
    %v1522 = vadd.f32 %v1520, 0.0
    %v1524 = vcombine.high %v1122, %v1122
    %v1526 = vunpack.c.l.s4 1966171168
    %v1527 = vunpack.c.0.s8 %v1526
    %v1528 = vlaneseq
    %v1529 = vshrl.u32 %v1528, 7
    %v1530 = vsub.s32 %v1527, %v1529
    %v1531 = vrot.slane %v1122, %v1530
    %v1533 = vunpack.c.l.s4 1966171168
    %v1534 = vunpack.c.0.s8 %v1533
    %v1535 = vlaneseq
    %v1536 = vshrl.u32 %v1535, 7
    %v1537 = vsub.s32 %v1534, %v1536
    %v1538 = vrot.slane %v1524, %v1537
    %v1539 = vcombine.high %v1531, %v1531
    %v1540 = vcombine.high %v1538, %v1538
    %v1542 = vunpack.c.l.s4 1966171168
    %v1543 = vunpack.c.0.s8 %v1542
    %v1544 = vlaneseq
    %v1545 = vshrl.u32 %v1544, 7
    %v1546 = vsub.s32 %v1543, %v1545
    %v1547 = vrot.slane %v1531, %v1546
    %v1549 = vunpack.c.l.s4 1966171168
    %v1550 = vunpack.c.0.s8 %v1549
    %v1551 = vlaneseq
    %v1552 = vshrl.u32 %v1551, 7
    %v1553 = vsub.s32 %v1550, %v1552
    %v1554 = vrot.slane %v1538, %v1553
    %v1556 = vunpack.c.l.s4 1966171168
    %v1557 = vunpack.c.0.s8 %v1556
    %v1558 = vlaneseq
    %v1559 = vshrl.u32 %v1558, 7
    %v1560 = vsub.s32 %v1557, %v1559
    %v1561 = vrot.slane %v1539, %v1560
    %v1563 = vunpack.c.l.s4 1966171168
    %v1564 = vunpack.c.0.s8 %v1563
    %v1565 = vlaneseq
    %v1566 = vshrl.u32 %v1565, 7
    %v1567 = vsub.s32 %v1564, %v1566
    %v1568 = vrot.slane %v1540, %v1567
    %v1569 = vcombine.high %v1547, %v1547
    %v1570 = vcombine.high %v1554, %v1554
    %v1571 = vcombine.high %v1561, %v1561
    %v1572 = vcombine.high %v1568, %v1568
    %v1573 = vlaneseq
    %v1574 = vshrl.u32 %v1573, 7
    %v1575 = vsub.s32 0, %v1574
    %v1576 = vrot.slane %v1547, %v1575
    %v1577 = vlaneseq
    %v1578 = vshrl.u32 %v1577, 7
    %v1579 = vsub.s32 0, %v1578
    %v1580 = vrot.slane %v1561, %v1579
    %v1581 = vlaneseq
    %v1582 = vshrl.u32 %v1581, 7
    %v1583 = vsub.s32 0, %v1582
    %v1584 = vrot.slane %v1569, %v1583
    %v1585 = vlaneseq
    %v1586 = vshrl.u32 %v1585, 7
    %v1587 = vsub.s32 0, %v1586
    %v1588 = vrot.slane %v1571, %v1587
    %v1589 = vlaneseq
    %v1590 = vshrl.u32 %v1589, 7
    %v1591 = vsub.s32 0, %v1590
    %v1592 = vrot.slane %v1554, %v1591
    %v1593 = vlaneseq
    %v1594 = vshrl.u32 %v1593, 7
    %v1595 = vsub.s32 0, %v1594
    %v1596 = vrot.slane %v1568, %v1595
    %v1597 = vlaneseq
    %v1598 = vshrl.u32 %v1597, 7
    %v1599 = vsub.s32 0, %v1598
    %v1600 = vrot.slane %v1570, %v1599
    %v1601 = vlaneseq
    %v1602 = vshrl.u32 %v1601, 7
    %v1603 = vsub.s32 0, %v1602
    %v1604 = vrot.slane %v1572, %v1603
    %1605 = vset.pattern.permute.xlu0 0
    %1606 = vperm.xlu0 %1605, %v1576
    %v1607 = vpop.permute.xlu0 %1606
    %1609 = vset.pattern.permute.xlu0 0
    %1610 = vperm.xlu0 %1609, %v1580
    %v1611 = vpop.permute.xlu0 %1610
    %1613 = vset.pattern.permute.xlu0 0
    %1614 = vperm.xlu0 %1613, %v1584
    %v1615 = vpop.permute.xlu0 %1614
    %1617 = vset.pattern.permute.xlu0 0
    %1618 = vperm.xlu0 %1617, %v1588
    %v1619 = vpop.permute.xlu0 %1618
    %1621 = vset.pattern.permute.xlu0 0
    %1622 = vperm.xlu0 %1621, %v1592
    %v1623 = vpop.permute.xlu0 %1622
    %1625 = vset.pattern.permute.xlu0 0
    %1626 = vperm.xlu0 %1625, %v1596
    %v1627 = vpop.permute.xlu0 %1626
    %1629 = vset.pattern.permute.xlu0 0
    %1630 = vperm.xlu0 %1629, %v1600
    %v1631 = vpop.permute.xlu0 %1630
    %1633 = vset.pattern.permute.xlu0 0
    %1634 = vperm.xlu0 %1633, %v1604
    %v1635 = vpop.permute.xlu0 %1634
    %v1637 = vadd.f32 %v1003, %v1607
    %v1638 = vadd.f32 %v1005, %v1607
    %v1639 = vadd.f32 %v1007, %v1611
    %v1640 = vadd.f32 %v1009, %v1611
    %v1641 = vadd.f32 %v1013, %v1615
    %v1642 = vadd.f32 %v1015, %v1615
    %v1643 = vadd.f32 %v1017, %v1619
    %v1644 = vadd.f32 %v1019, %v1619
    %v1645 = vadd.f32 %v1023, %v1623
    %v1646 = vadd.f32 %v1025, %v1623
    %v1647 = vadd.f32 %v1027, %v1627
    %v1648 = vadd.f32 %v1029, %v1627
    %v1649 = vadd.f32 %v1033, %v1631
    %v1650 = vadd.f32 %v1035, %v1631
    %v1651 = vadd.f32 %v1037, %v1635
    %v1652 = vadd.f32 %v1039, %v1635
    %v1653 = vxor.u32 %v1637, 2147483648
    %v1654 = vxor.u32 %v1638, 2147483648
    %v1655 = vxor.u32 %v1639, 2147483648
    %v1656 = vxor.u32 %v1640, 2147483648
    %v1657 = vxor.u32 %v1641, 2147483648
    %v1658 = vxor.u32 %v1642, 2147483648
    %v1659 = vxor.u32 %v1643, 2147483648
    %v1660 = vxor.u32 %v1644, 2147483648
    %v1661 = vxor.u32 %v1645, 2147483648
    %v1662 = vxor.u32 %v1646, 2147483648
    %v1663 = vxor.u32 %v1647, 2147483648
    %v1664 = vxor.u32 %v1648, 2147483648
    %v1665 = vxor.u32 %v1649, 2147483648
    %v1666 = vxor.u32 %v1650, 2147483648
    %v1667 = vxor.u32 %v1651, 2147483648
    %v1668 = vxor.u32 %v1652, 2147483648
    %v1669 = vmul.f32 %v1653, 1.442695
    %v1670 = vpow.pop %v1669
    %v1671 = vmul.f32 %v1654, 1.442695
    %v1672 = vpow.pop %v1671
    %v1673 = vmul.f32 %v1655, 1.442695
    %v1674 = vpow.pop %v1673
    %v1675 = vmul.f32 %v1656, 1.442695
    %v1676 = vpow.pop %v1675
    %v1677 = vmul.f32 %v1657, 1.442695
    %v1678 = vpow.pop %v1677
    %v1679 = vmul.f32 %v1658, 1.442695
    %v1680 = vpow.pop %v1679
    %v1681 = vmul.f32 %v1659, 1.442695
    %v1682 = vpow.pop %v1681
    %v1683 = vmul.f32 %v1660, 1.442695
    %v1684 = vpow.pop %v1683
    %v1685 = vmul.f32 %v1661, 1.442695
    %v1686 = vpow.pop %v1685
    %v1687 = vmul.f32 %v1662, 1.442695
    %v1688 = vpow.pop %v1687
    %v1689 = vmul.f32 %v1663, 1.442695
    %v1690 = vpow.pop %v1689
    %v1691 = vmul.f32 %v1664, 1.442695
    %v1692 = vpow.pop %v1691
    %v1693 = vmul.f32 %v1665, 1.442695
    %v1694 = vpow.pop %v1693
    %v1695 = vmul.f32 %v1666, 1.442695
    %v1696 = vpow.pop %v1695
    %v1697 = vmul.f32 %v1667, 1.442695
    %v1698 = vpow.pop %v1697
    %v1699 = vmul.f32 %v1668, 1.442695
    %v1700 = vpow.pop %v1699
    %v1701 = vadd.f32 %v1670, 1.0
    %v1702 = vadd.f32 %v1672, 1.0
    %v1703 = vadd.f32 %v1674, 1.0
    %v1704 = vadd.f32 %v1676, 1.0
    %v1705 = vadd.f32 %v1678, 1.0
    %v1706 = vadd.f32 %v1680, 1.0
    %v1707 = vadd.f32 %v1682, 1.0
    %v1708 = vadd.f32 %v1684, 1.0
    %v1709 = vadd.f32 %v1686, 1.0
    %v1710 = vadd.f32 %v1688, 1.0
    %v1711 = vadd.f32 %v1690, 1.0
    %v1712 = vadd.f32 %v1692, 1.0
    %v1713 = vadd.f32 %v1694, 1.0
    %v1714 = vadd.f32 %v1696, 1.0
    %v1715 = vadd.f32 %v1698, 1.0
    %v1716 = vadd.f32 %v1700, 1.0
    %v1717 = vrcp.pop %v1701
    %v1718 = vmul.f32 1.0, %v1717
    %v1719 = vrcp.pop %v1702
    %v1720 = vmul.f32 1.0, %v1719
    %v1721 = vrcp.pop %v1703
    %v1722 = vmul.f32 1.0, %v1721
    %v1723 = vrcp.pop %v1704
    %v1724 = vmul.f32 1.0, %v1723
    %v1725 = vrcp.pop %v1705
    %v1726 = vmul.f32 1.0, %v1725
    %v1727 = vrcp.pop %v1706
    %v1728 = vmul.f32 1.0, %v1727
    %v1729 = vrcp.pop %v1707
    %v1730 = vmul.f32 1.0, %v1729
    %v1731 = vrcp.pop %v1708
    %v1732 = vmul.f32 1.0, %v1731
    %v1733 = vrcp.pop %v1709
    %v1734 = vmul.f32 1.0, %v1733
    %v1735 = vrcp.pop %v1710
    %v1736 = vmul.f32 1.0, %v1735
    %v1737 = vrcp.pop %v1711
    %v1738 = vmul.f32 1.0, %v1737
    %v1739 = vrcp.pop %v1712
    %v1740 = vmul.f32 1.0, %v1739
    %v1741 = vrcp.pop %v1713
    %v1742 = vmul.f32 1.0, %v1741
    %v1743 = vrcp.pop %v1714
    %v1744 = vmul.f32 1.0, %v1743
    %v1745 = vrcp.pop %v1715
    %v1746 = vmul.f32 1.0, %v1745
    %v1747 = vrcp.pop %v1716
    %v1748 = vmul.f32 1.0, %v1747
    %v1751 = vcombine.low %v1127, %v1128
    %v1752 = vcombine.high %v1127, %v1128
    %v1754 = vunpack.c.l.s4 1966171168
    %v1755 = vunpack.c.0.s8 %v1754
    %v1756 = vlaneseq
    %v1757 = vshrl.u32 %v1756, 7
    %v1758 = vsub.s32 %v1755, %v1757
    %v1759 = vrot.slane %v1751, %v1758
    %v1761 = vunpack.c.l.s4 1966171168
    %v1762 = vunpack.c.0.s8 %v1761
    %v1763 = vlaneseq
    %v1764 = vshrl.u32 %v1763, 7
    %v1765 = vsub.s32 %v1762, %v1764
    %v1766 = vrot.slane %v1752, %v1765
    %v1767 = vcombine.high %v1759, %v1759
    %v1768 = vcombine.high %v1766, %v1766
    %v1770 = vunpack.c.l.s4 1966171168
    %v1771 = vunpack.c.0.s8 %v1770
    %v1772 = vlaneseq
    %v1773 = vshrl.u32 %v1772, 7
    %v1774 = vsub.s32 %v1771, %v1773
    %v1775 = vrot.slane %v1759, %v1774
    %v1777 = vunpack.c.l.s4 1966171168
    %v1778 = vunpack.c.0.s8 %v1777
    %v1779 = vlaneseq
    %v1780 = vshrl.u32 %v1779, 7
    %v1781 = vsub.s32 %v1778, %v1780
    %v1782 = vrot.slane %v1766, %v1781
    %v1784 = vunpack.c.l.s4 1966171168
    %v1785 = vunpack.c.0.s8 %v1784
    %v1786 = vlaneseq
    %v1787 = vshrl.u32 %v1786, 7
    %v1788 = vsub.s32 %v1785, %v1787
    %v1789 = vrot.slane %v1767, %v1788
    %v1791 = vunpack.c.l.s4 1966171168
    %v1792 = vunpack.c.0.s8 %v1791
    %v1793 = vlaneseq
    %v1794 = vshrl.u32 %v1793, 7
    %v1795 = vsub.s32 %v1792, %v1794
    %v1796 = vrot.slane %v1768, %v1795
    %v1797 = vcombine.high %v1775, %v1775
    %v1798 = vcombine.high %v1782, %v1782
    %v1799 = vcombine.high %v1789, %v1789
    %v1800 = vcombine.high %v1796, %v1796
    %v1801 = vlaneseq
    %v1802 = vshrl.u32 %v1801, 7
    %v1803 = vsub.s32 0, %v1802
    %v1804 = vrot.slane %v1775, %v1803
    %v1805 = vlaneseq
    %v1806 = vshrl.u32 %v1805, 7
    %v1807 = vsub.s32 1, %v1806
    %v1808 = vrot.slane %v1775, %v1807
    %v1809 = vlaneseq
    %v1810 = vshrl.u32 %v1809, 7
    %v1811 = vsub.s32 0, %v1810
    %v1812 = vrot.slane %v1789, %v1811
    %v1813 = vlaneseq
    %v1814 = vshrl.u32 %v1813, 7
    %v1815 = vsub.s32 1, %v1814
    %v1816 = vrot.slane %v1789, %v1815
    %v1817 = vlaneseq
    %v1818 = vshrl.u32 %v1817, 7
    %v1819 = vsub.s32 0, %v1818
    %v1820 = vrot.slane %v1797, %v1819
    %v1821 = vlaneseq
    %v1822 = vshrl.u32 %v1821, 7
    %v1823 = vsub.s32 1, %v1822
    %v1824 = vrot.slane %v1797, %v1823
    %v1825 = vlaneseq
    %v1826 = vshrl.u32 %v1825, 7
    %v1827 = vsub.s32 0, %v1826
    %v1828 = vrot.slane %v1799, %v1827
    %v1829 = vlaneseq
    %v1830 = vshrl.u32 %v1829, 7
    %v1831 = vsub.s32 1, %v1830
    %v1832 = vrot.slane %v1799, %v1831
    %v1833 = vlaneseq
    %v1834 = vshrl.u32 %v1833, 7
    %v1835 = vsub.s32 0, %v1834
    %v1836 = vrot.slane %v1782, %v1835
    %v1837 = vlaneseq
    %v1838 = vshrl.u32 %v1837, 7
    %v1839 = vsub.s32 1, %v1838
    %v1840 = vrot.slane %v1782, %v1839
    %v1841 = vlaneseq
    %v1842 = vshrl.u32 %v1841, 7
    %v1843 = vsub.s32 0, %v1842
    %v1844 = vrot.slane %v1796, %v1843
    %v1845 = vlaneseq
    %v1846 = vshrl.u32 %v1845, 7
    %v1847 = vsub.s32 1, %v1846
    %v1848 = vrot.slane %v1796, %v1847
    %v1849 = vlaneseq
    %v1850 = vshrl.u32 %v1849, 7
    %v1851 = vsub.s32 0, %v1850
    %v1852 = vrot.slane %v1798, %v1851
    %v1853 = vlaneseq
    %v1854 = vshrl.u32 %v1853, 7
    %v1855 = vsub.s32 1, %v1854
    %v1856 = vrot.slane %v1798, %v1855
    %v1857 = vlaneseq
    %v1858 = vshrl.u32 %v1857, 7
    %v1859 = vsub.s32 0, %v1858
    %v1860 = vrot.slane %v1800, %v1859
    %v1861 = vlaneseq
    %v1862 = vshrl.u32 %v1861, 7
    %v1863 = vsub.s32 1, %v1862
    %v1864 = vrot.slane %v1800, %v1863
    %v1881 = vmul.f32 %v1718, %v1804
    %v1882 = vmul.f32 %v1720, %v1808
    %v1883 = vmul.f32 %v1722, %v1812
    %v1884 = vmul.f32 %v1724, %v1816
    %v1885 = vmul.f32 %v1726, %v1820
    %v1886 = vmul.f32 %v1728, %v1824
    %v1887 = vmul.f32 %v1730, %v1828
    %v1888 = vmul.f32 %v1732, %v1832
    %v1889 = vmul.f32 %v1734, %v1836
    %v1890 = vmul.f32 %v1736, %v1840
    %v1891 = vmul.f32 %v1738, %v1844
    %v1892 = vmul.f32 %v1740, %v1848
    %v1893 = vmul.f32 %v1742, %v1852
    %v1894 = vmul.f32 %v1744, %v1856
    %v1895 = vmul.f32 %v1746, %v1860
    %v1896 = vmul.f32 %v1748, %v1864
    %v1897 = vadd.f32 %v1881, %v1883
    %v1898 = vadd.f32 %v1897, %v1885
    %v1899 = vadd.f32 %v1898, %v1887
    %v1900 = vadd.f32 %v1899, %v1889
    %v1901 = vadd.f32 %v1900, %v1891
    %v1902 = vadd.f32 %v1901, %v1893
    %v1903 = vadd.f32 %v1902, %v1895
    %v1904 = vadd.f32 %v1882, %v1884
    %v1905 = vadd.f32 %v1904, %v1886
    %v1906 = vadd.f32 %v1905, %v1888
    %v1907 = vadd.f32 %v1906, %v1890
    %v1908 = vadd.f32 %v1907, %v1892
    %v1909 = vadd.f32 %v1908, %v1894
    %v1910 = vadd.f32 %v1909, %v1896
    %v1911 = vadd.f32 %v1521, %v1903
    %v1912 = vadd.f32 %v1522, %v1910
    %v1914 = vcombine.high %v1123, %v1123
    %v1916 = vunpack.c.l.s4 1966171168
    %v1917 = vunpack.c.0.s8 %v1916
    %v1918 = vlaneseq
    %v1919 = vshrl.u32 %v1918, 7
    %v1920 = vsub.s32 %v1917, %v1919
    %v1921 = vrot.slane %v1123, %v1920
    %v1923 = vunpack.c.l.s4 1966171168
    %v1924 = vunpack.c.0.s8 %v1923
    %v1925 = vlaneseq
    %v1926 = vshrl.u32 %v1925, 7
    %v1927 = vsub.s32 %v1924, %v1926
    %v1928 = vrot.slane %v1914, %v1927
    %v1929 = vcombine.high %v1921, %v1921
    %v1930 = vcombine.high %v1928, %v1928
    %v1932 = vunpack.c.l.s4 1966171168
    %v1933 = vunpack.c.0.s8 %v1932
    %v1934 = vlaneseq
    %v1935 = vshrl.u32 %v1934, 7
    %v1936 = vsub.s32 %v1933, %v1935
    %v1937 = vrot.slane %v1921, %v1936
    %v1939 = vunpack.c.l.s4 1966171168
    %v1940 = vunpack.c.0.s8 %v1939
    %v1941 = vlaneseq
    %v1942 = vshrl.u32 %v1941, 7
    %v1943 = vsub.s32 %v1940, %v1942
    %v1944 = vrot.slane %v1928, %v1943
    %v1946 = vunpack.c.l.s4 1966171168
    %v1947 = vunpack.c.0.s8 %v1946
    %v1948 = vlaneseq
    %v1949 = vshrl.u32 %v1948, 7
    %v1950 = vsub.s32 %v1947, %v1949
    %v1951 = vrot.slane %v1929, %v1950
    %v1953 = vunpack.c.l.s4 1966171168
    %v1954 = vunpack.c.0.s8 %v1953
    %v1955 = vlaneseq
    %v1956 = vshrl.u32 %v1955, 7
    %v1957 = vsub.s32 %v1954, %v1956
    %v1958 = vrot.slane %v1930, %v1957
    %v1959 = vcombine.high %v1937, %v1937
    %v1960 = vcombine.high %v1944, %v1944
    %v1961 = vcombine.high %v1951, %v1951
    %v1962 = vcombine.high %v1958, %v1958
    %v1963 = vlaneseq
    %v1964 = vshrl.u32 %v1963, 7
    %v1965 = vsub.s32 0, %v1964
    %v1966 = vrot.slane %v1937, %v1965
    %v1967 = vlaneseq
    %v1968 = vshrl.u32 %v1967, 7
    %v1969 = vsub.s32 0, %v1968
    %v1970 = vrot.slane %v1951, %v1969
    %v1971 = vlaneseq
    %v1972 = vshrl.u32 %v1971, 7
    %v1973 = vsub.s32 0, %v1972
    %v1974 = vrot.slane %v1959, %v1973
    %v1975 = vlaneseq
    %v1976 = vshrl.u32 %v1975, 7
    %v1977 = vsub.s32 0, %v1976
    %v1978 = vrot.slane %v1961, %v1977
    %v1979 = vlaneseq
    %v1980 = vshrl.u32 %v1979, 7
    %v1981 = vsub.s32 0, %v1980
    %v1982 = vrot.slane %v1944, %v1981
    %v1983 = vlaneseq
    %v1984 = vshrl.u32 %v1983, 7
    %v1985 = vsub.s32 0, %v1984
    %v1986 = vrot.slane %v1958, %v1985
    %v1987 = vlaneseq
    %v1988 = vshrl.u32 %v1987, 7
    %v1989 = vsub.s32 0, %v1988
    %v1990 = vrot.slane %v1960, %v1989
    %v1991 = vlaneseq
    %v1992 = vshrl.u32 %v1991, 7
    %v1993 = vsub.s32 0, %v1992
    %v1994 = vrot.slane %v1962, %v1993
    %1995 = vset.pattern.permute.xlu0 0
    %1996 = vperm.xlu0 %1995, %v1966
    %v1997 = vpop.permute.xlu0 %1996
    %1999 = vset.pattern.permute.xlu0 0
    %2000 = vperm.xlu0 %1999, %v1970
    %v2001 = vpop.permute.xlu0 %2000
    %2003 = vset.pattern.permute.xlu0 0
    %2004 = vperm.xlu0 %2003, %v1974
    %v2005 = vpop.permute.xlu0 %2004
    %2007 = vset.pattern.permute.xlu0 0
    %2008 = vperm.xlu0 %2007, %v1978
    %v2009 = vpop.permute.xlu0 %2008
    %2011 = vset.pattern.permute.xlu0 0
    %2012 = vperm.xlu0 %2011, %v1982
    %v2013 = vpop.permute.xlu0 %2012
    %2015 = vset.pattern.permute.xlu0 0
    %2016 = vperm.xlu0 %2015, %v1986
    %v2017 = vpop.permute.xlu0 %2016
    %2019 = vset.pattern.permute.xlu0 0
    %2020 = vperm.xlu0 %2019, %v1990
    %v2021 = vpop.permute.xlu0 %2020
    %2023 = vset.pattern.permute.xlu0 0
    %2024 = vperm.xlu0 %2023, %v1994
    %v2025 = vpop.permute.xlu0 %2024
    %v2027 = vadd.f32 %v1043, %v1997
    %v2028 = vadd.f32 %v1045, %v1997
    %v2029 = vadd.f32 %v1047, %v2001
    %v2030 = vadd.f32 %v1049, %v2001
    %v2031 = vadd.f32 %v1053, %v2005
    %v2032 = vadd.f32 %v1055, %v2005
    %v2033 = vadd.f32 %v1057, %v2009
    %v2034 = vadd.f32 %v1059, %v2009
    %v2035 = vadd.f32 %v1063, %v2013
    %v2036 = vadd.f32 %v1065, %v2013
    %v2037 = vadd.f32 %v1067, %v2017
    %v2038 = vadd.f32 %v1069, %v2017
    %v2039 = vadd.f32 %v1073, %v2021
    %v2040 = vadd.f32 %v1075, %v2021
    %v2041 = vadd.f32 %v1077, %v2025
    %v2042 = vadd.f32 %v1079, %v2025
    %v2043 = vxor.u32 %v2027, 2147483648
    %v2044 = vxor.u32 %v2028, 2147483648
    %v2045 = vxor.u32 %v2029, 2147483648
    %v2046 = vxor.u32 %v2030, 2147483648
    %v2047 = vxor.u32 %v2031, 2147483648
    %v2048 = vxor.u32 %v2032, 2147483648
    %v2049 = vxor.u32 %v2033, 2147483648
    %v2050 = vxor.u32 %v2034, 2147483648
    %v2051 = vxor.u32 %v2035, 2147483648
    %v2052 = vxor.u32 %v2036, 2147483648
    %v2053 = vxor.u32 %v2037, 2147483648
    %v2054 = vxor.u32 %v2038, 2147483648
    %v2055 = vxor.u32 %v2039, 2147483648
    %v2056 = vxor.u32 %v2040, 2147483648
    %v2057 = vxor.u32 %v2041, 2147483648
    %v2058 = vxor.u32 %v2042, 2147483648
    %v2059 = vmul.f32 %v2043, 1.442695
    %v2060 = vpow.pop %v2059
    %v2061 = vmul.f32 %v2044, 1.442695
    %v2062 = vpow.pop %v2061
    %v2063 = vmul.f32 %v2045, 1.442695
    %v2064 = vpow.pop %v2063
    %v2065 = vmul.f32 %v2046, 1.442695
    %v2066 = vpow.pop %v2065
    %v2067 = vmul.f32 %v2047, 1.442695
    %v2068 = vpow.pop %v2067
    %v2069 = vmul.f32 %v2048, 1.442695
    %v2070 = vpow.pop %v2069
    %v2071 = vmul.f32 %v2049, 1.442695
    %v2072 = vpow.pop %v2071
    %v2073 = vmul.f32 %v2050, 1.442695
    %v2074 = vpow.pop %v2073
    %v2075 = vmul.f32 %v2051, 1.442695
    %v2076 = vpow.pop %v2075
    %v2077 = vmul.f32 %v2052, 1.442695
    %v2078 = vpow.pop %v2077
    %v2079 = vmul.f32 %v2053, 1.442695
    %v2080 = vpow.pop %v2079
    %v2081 = vmul.f32 %v2054, 1.442695
    %v2082 = vpow.pop %v2081
    %v2083 = vmul.f32 %v2055, 1.442695
    %v2084 = vpow.pop %v2083
    %v2085 = vmul.f32 %v2056, 1.442695
    %v2086 = vpow.pop %v2085
    %v2087 = vmul.f32 %v2057, 1.442695
    %v2088 = vpow.pop %v2087
    %v2089 = vmul.f32 %v2058, 1.442695
    %v2090 = vpow.pop %v2089
    %v2091 = vadd.f32 %v2060, 1.0
    %v2092 = vadd.f32 %v2062, 1.0
    %v2093 = vadd.f32 %v2064, 1.0
    %v2094 = vadd.f32 %v2066, 1.0
    %v2095 = vadd.f32 %v2068, 1.0
    %v2096 = vadd.f32 %v2070, 1.0
    %v2097 = vadd.f32 %v2072, 1.0
    %v2098 = vadd.f32 %v2074, 1.0
    %v2099 = vadd.f32 %v2076, 1.0
    %v2100 = vadd.f32 %v2078, 1.0
    %v2101 = vadd.f32 %v2080, 1.0
    %v2102 = vadd.f32 %v2082, 1.0
    %v2103 = vadd.f32 %v2084, 1.0
    %v2104 = vadd.f32 %v2086, 1.0
    %v2105 = vadd.f32 %v2088, 1.0
    %v2106 = vadd.f32 %v2090, 1.0
    %v2107 = vrcp.pop %v2091
    %v2108 = vmul.f32 1.0, %v2107
    %v2109 = vrcp.pop %v2092
    %v2110 = vmul.f32 1.0, %v2109
    %v2111 = vrcp.pop %v2093
    %v2112 = vmul.f32 1.0, %v2111
    %v2113 = vrcp.pop %v2094
    %v2114 = vmul.f32 1.0, %v2113
    %v2115 = vrcp.pop %v2095
    %v2116 = vmul.f32 1.0, %v2115
    %v2117 = vrcp.pop %v2096
    %v2118 = vmul.f32 1.0, %v2117
    %v2119 = vrcp.pop %v2097
    %v2120 = vmul.f32 1.0, %v2119
    %v2121 = vrcp.pop %v2098
    %v2122 = vmul.f32 1.0, %v2121
    %v2123 = vrcp.pop %v2099
    %v2124 = vmul.f32 1.0, %v2123
    %v2125 = vrcp.pop %v2100
    %v2126 = vmul.f32 1.0, %v2125
    %v2127 = vrcp.pop %v2101
    %v2128 = vmul.f32 1.0, %v2127
    %v2129 = vrcp.pop %v2102
    %v2130 = vmul.f32 1.0, %v2129
    %v2131 = vrcp.pop %v2103
    %v2132 = vmul.f32 1.0, %v2131
    %v2133 = vrcp.pop %v2104
    %v2134 = vmul.f32 1.0, %v2133
    %v2135 = vrcp.pop %v2105
    %v2136 = vmul.f32 1.0, %v2135
    %v2137 = vrcp.pop %v2106
    %v2138 = vmul.f32 1.0, %v2137
    %v2141 = vcombine.low %v1129, %v1130
    %v2142 = vcombine.high %v1129, %v1130
    %v2144 = vunpack.c.l.s4 1966171168
    %v2145 = vunpack.c.0.s8 %v2144
    %v2146 = vlaneseq
    %v2147 = vshrl.u32 %v2146, 7
    %v2148 = vsub.s32 %v2145, %v2147
    %v2149 = vrot.slane %v2141, %v2148
    %v2151 = vunpack.c.l.s4 1966171168
    %v2152 = vunpack.c.0.s8 %v2151
    %v2153 = vlaneseq
    %v2154 = vshrl.u32 %v2153, 7
    %v2155 = vsub.s32 %v2152, %v2154
    %v2156 = vrot.slane %v2142, %v2155
    %v2157 = vcombine.high %v2149, %v2149
    %v2158 = vcombine.high %v2156, %v2156
    %v2160 = vunpack.c.l.s4 1966171168
    %v2161 = vunpack.c.0.s8 %v2160
    %v2162 = vlaneseq
    %v2163 = vshrl.u32 %v2162, 7
    %v2164 = vsub.s32 %v2161, %v2163
    %v2165 = vrot.slane %v2149, %v2164
    %v2167 = vunpack.c.l.s4 1966171168
    %v2168 = vunpack.c.0.s8 %v2167
    %v2169 = vlaneseq
    %v2170 = vshrl.u32 %v2169, 7
    %v2171 = vsub.s32 %v2168, %v2170
    %v2172 = vrot.slane %v2156, %v2171
    %v2174 = vunpack.c.l.s4 1966171168
    %v2175 = vunpack.c.0.s8 %v2174
    %v2176 = vlaneseq
    %v2177 = vshrl.u32 %v2176, 7
    %v2178 = vsub.s32 %v2175, %v2177
    %v2179 = vrot.slane %v2157, %v2178
    %v2181 = vunpack.c.l.s4 1966171168
    %v2182 = vunpack.c.0.s8 %v2181
    %v2183 = vlaneseq
    %v2184 = vshrl.u32 %v2183, 7
    %v2185 = vsub.s32 %v2182, %v2184
    %v2186 = vrot.slane %v2158, %v2185
    %v2187 = vcombine.high %v2165, %v2165
    %v2188 = vcombine.high %v2172, %v2172
    %v2189 = vcombine.high %v2179, %v2179
    %v2190 = vcombine.high %v2186, %v2186
    %v2191 = vlaneseq
    %v2192 = vshrl.u32 %v2191, 7
    %v2193 = vsub.s32 0, %v2192
    %v2194 = vrot.slane %v2165, %v2193
    %v2195 = vlaneseq
    %v2196 = vshrl.u32 %v2195, 7
    %v2197 = vsub.s32 1, %v2196
    %v2198 = vrot.slane %v2165, %v2197
    %v2199 = vlaneseq
    %v2200 = vshrl.u32 %v2199, 7
    %v2201 = vsub.s32 0, %v2200
    %v2202 = vrot.slane %v2179, %v2201
    %v2203 = vlaneseq
    %v2204 = vshrl.u32 %v2203, 7
    %v2205 = vsub.s32 1, %v2204
    %v2206 = vrot.slane %v2179, %v2205
    %v2207 = vlaneseq
    %v2208 = vshrl.u32 %v2207, 7
    %v2209 = vsub.s32 0, %v2208
    %v2210 = vrot.slane %v2187, %v2209
    %v2211 = vlaneseq
    %v2212 = vshrl.u32 %v2211, 7
    %v2213 = vsub.s32 1, %v2212
    %v2214 = vrot.slane %v2187, %v2213
    %v2215 = vlaneseq
    %v2216 = vshrl.u32 %v2215, 7
    %v2217 = vsub.s32 0, %v2216
    %v2218 = vrot.slane %v2189, %v2217
    %v2219 = vlaneseq
    %v2220 = vshrl.u32 %v2219, 7
    %v2221 = vsub.s32 1, %v2220
    %v2222 = vrot.slane %v2189, %v2221
    %v2223 = vlaneseq
    %v2224 = vshrl.u32 %v2223, 7
    %v2225 = vsub.s32 0, %v2224
    %v2226 = vrot.slane %v2172, %v2225
    %v2227 = vlaneseq
    %v2228 = vshrl.u32 %v2227, 7
    %v2229 = vsub.s32 1, %v2228
    %v2230 = vrot.slane %v2172, %v2229
    %v2231 = vlaneseq
    %v2232 = vshrl.u32 %v2231, 7
    %v2233 = vsub.s32 0, %v2232
    %v2234 = vrot.slane %v2186, %v2233
    %v2235 = vlaneseq
    %v2236 = vshrl.u32 %v2235, 7
    %v2237 = vsub.s32 1, %v2236
    %v2238 = vrot.slane %v2186, %v2237
    %v2239 = vlaneseq
    %v2240 = vshrl.u32 %v2239, 7
    %v2241 = vsub.s32 0, %v2240
    %v2242 = vrot.slane %v2188, %v2241
    %v2243 = vlaneseq
    %v2244 = vshrl.u32 %v2243, 7
    %v2245 = vsub.s32 1, %v2244
    %v2246 = vrot.slane %v2188, %v2245
    %v2247 = vlaneseq
    %v2248 = vshrl.u32 %v2247, 7
    %v2249 = vsub.s32 0, %v2248
    %v2250 = vrot.slane %v2190, %v2249
    %v2251 = vlaneseq
    %v2252 = vshrl.u32 %v2251, 7
    %v2253 = vsub.s32 1, %v2252
    %v2254 = vrot.slane %v2190, %v2253
    %v2271 = vmul.f32 %v2108, %v2194
    %v2272 = vmul.f32 %v2110, %v2198
    %v2273 = vmul.f32 %v2112, %v2202
    %v2274 = vmul.f32 %v2114, %v2206
    %v2275 = vmul.f32 %v2116, %v2210
    %v2276 = vmul.f32 %v2118, %v2214
    %v2277 = vmul.f32 %v2120, %v2218
    %v2278 = vmul.f32 %v2122, %v2222
    %v2279 = vmul.f32 %v2124, %v2226
    %v2280 = vmul.f32 %v2126, %v2230
    %v2281 = vmul.f32 %v2128, %v2234
    %v2282 = vmul.f32 %v2130, %v2238
    %v2283 = vmul.f32 %v2132, %v2242
    %v2284 = vmul.f32 %v2134, %v2246
    %v2285 = vmul.f32 %v2136, %v2250
    %v2286 = vmul.f32 %v2138, %v2254
    %v2287 = vadd.f32 %v2271, %v2273
    %v2288 = vadd.f32 %v2287, %v2275
    %v2289 = vadd.f32 %v2288, %v2277
    %v2290 = vadd.f32 %v2289, %v2279
    %v2291 = vadd.f32 %v2290, %v2281
    %v2292 = vadd.f32 %v2291, %v2283
    %v2293 = vadd.f32 %v2292, %v2285
    %v2294 = vadd.f32 %v2272, %v2274
    %v2295 = vadd.f32 %v2294, %v2276
    %v2296 = vadd.f32 %v2295, %v2278
    %v2297 = vadd.f32 %v2296, %v2280
    %v2298 = vadd.f32 %v2297, %v2282
    %v2299 = vadd.f32 %v2298, %v2284
    %v2300 = vadd.f32 %v2299, %v2286
    %v2301 = vadd.f32 %v1911, %v2293
    %v2302 = vadd.f32 %v1912, %v2300
    %v2304 = vcombine.high %v1124, %v1124
    %v2306 = vunpack.c.l.s4 1966171168
    %v2307 = vunpack.c.0.s8 %v2306
    %v2308 = vlaneseq
    %v2309 = vshrl.u32 %v2308, 7
    %v2310 = vsub.s32 %v2307, %v2309
    %v2311 = vrot.slane %v1124, %v2310
    %v2313 = vunpack.c.l.s4 1966171168
    %v2314 = vunpack.c.0.s8 %v2313
    %v2315 = vlaneseq
    %v2316 = vshrl.u32 %v2315, 7
    %v2317 = vsub.s32 %v2314, %v2316
    %v2318 = vrot.slane %v2304, %v2317
    %v2319 = vcombine.high %v2311, %v2311
    %v2320 = vcombine.high %v2318, %v2318
    %v2322 = vunpack.c.l.s4 1966171168
    %v2323 = vunpack.c.0.s8 %v2322
    %v2324 = vlaneseq
    %v2325 = vshrl.u32 %v2324, 7
    %v2326 = vsub.s32 %v2323, %v2325
    %v2327 = vrot.slane %v2311, %v2326
    %v2329 = vunpack.c.l.s4 1966171168
    %v2330 = vunpack.c.0.s8 %v2329
    %v2331 = vlaneseq
    %v2332 = vshrl.u32 %v2331, 7
    %v2333 = vsub.s32 %v2330, %v2332
    %v2334 = vrot.slane %v2318, %v2333
    %v2336 = vunpack.c.l.s4 1966171168
    %v2337 = vunpack.c.0.s8 %v2336
    %v2338 = vlaneseq
    %v2339 = vshrl.u32 %v2338, 7
    %v2340 = vsub.s32 %v2337, %v2339
    %v2341 = vrot.slane %v2319, %v2340
    %v2343 = vunpack.c.l.s4 1966171168
    %v2344 = vunpack.c.0.s8 %v2343
    %v2345 = vlaneseq
    %v2346 = vshrl.u32 %v2345, 7
    %v2347 = vsub.s32 %v2344, %v2346
    %v2348 = vrot.slane %v2320, %v2347
    %v2349 = vcombine.high %v2327, %v2327
    %v2350 = vcombine.high %v2334, %v2334
    %v2351 = vcombine.high %v2341, %v2341
    %v2352 = vcombine.high %v2348, %v2348
    %v2353 = vlaneseq
    %v2354 = vshrl.u32 %v2353, 7
    %v2355 = vsub.s32 0, %v2354
    %v2356 = vrot.slane %v2327, %v2355
    %v2357 = vlaneseq
    %v2358 = vshrl.u32 %v2357, 7
    %v2359 = vsub.s32 0, %v2358
    %v2360 = vrot.slane %v2341, %v2359
    %v2361 = vlaneseq
    %v2362 = vshrl.u32 %v2361, 7
    %v2363 = vsub.s32 0, %v2362
    %v2364 = vrot.slane %v2349, %v2363
    %v2365 = vlaneseq
    %v2366 = vshrl.u32 %v2365, 7
    %v2367 = vsub.s32 0, %v2366
    %v2368 = vrot.slane %v2351, %v2367
    %v2369 = vlaneseq
    %v2370 = vshrl.u32 %v2369, 7
    %v2371 = vsub.s32 0, %v2370
    %v2372 = vrot.slane %v2334, %v2371
    %v2373 = vlaneseq
    %v2374 = vshrl.u32 %v2373, 7
    %v2375 = vsub.s32 0, %v2374
    %v2376 = vrot.slane %v2348, %v2375
    %v2377 = vlaneseq
    %v2378 = vshrl.u32 %v2377, 7
    %v2379 = vsub.s32 0, %v2378
    %v2380 = vrot.slane %v2350, %v2379
    %v2381 = vlaneseq
    %v2382 = vshrl.u32 %v2381, 7
    %v2383 = vsub.s32 0, %v2382
    %v2384 = vrot.slane %v2352, %v2383
    %2385 = vset.pattern.permute.xlu0 0
    %2386 = vperm.xlu0 %2385, %v2356
    %v2387 = vpop.permute.xlu0 %2386
    %2389 = vset.pattern.permute.xlu0 0
    %2390 = vperm.xlu0 %2389, %v2360
    %v2391 = vpop.permute.xlu0 %2390
    %2393 = vset.pattern.permute.xlu0 0
    %2394 = vperm.xlu0 %2393, %v2364
    %v2395 = vpop.permute.xlu0 %2394
    %2397 = vset.pattern.permute.xlu0 0
    %2398 = vperm.xlu0 %2397, %v2368
    %v2399 = vpop.permute.xlu0 %2398
    %2401 = vset.pattern.permute.xlu0 0
    %2402 = vperm.xlu0 %2401, %v2372
    %v2403 = vpop.permute.xlu0 %2402
    %2405 = vset.pattern.permute.xlu0 0
    %2406 = vperm.xlu0 %2405, %v2376
    %v2407 = vpop.permute.xlu0 %2406
    %2409 = vset.pattern.permute.xlu0 0
    %2410 = vperm.xlu0 %2409, %v2380
    %v2411 = vpop.permute.xlu0 %2410
    %2413 = vset.pattern.permute.xlu0 0
    %2414 = vperm.xlu0 %2413, %v2384
    %v2415 = vpop.permute.xlu0 %2414
    %v2417 = vadd.f32 %v1083, %v2387
    %v2418 = vadd.f32 %v1085, %v2387
    %v2419 = vadd.f32 %v1087, %v2391
    %v2420 = vadd.f32 %v1089, %v2391
    %v2421 = vadd.f32 %v1093, %v2395
    %v2422 = vadd.f32 %v1095, %v2395
    %v2423 = vadd.f32 %v1097, %v2399
    %v2424 = vadd.f32 %v1099, %v2399
    %v2425 = vadd.f32 %v1103, %v2403
    %v2426 = vadd.f32 %v1105, %v2403
    %v2427 = vadd.f32 %v1107, %v2407
    %v2428 = vadd.f32 %v1109, %v2407
    %v2429 = vadd.f32 %v1113, %v2411
    %v2430 = vadd.f32 %v1115, %v2411
    %v2431 = vadd.f32 %v1117, %v2415
    %v2432 = vadd.f32 %v1119, %v2415
    %v2433 = vxor.u32 %v2417, 2147483648
    %v2434 = vxor.u32 %v2418, 2147483648
    %v2435 = vxor.u32 %v2419, 2147483648
    %v2436 = vxor.u32 %v2420, 2147483648
    %v2437 = vxor.u32 %v2421, 2147483648
    %v2438 = vxor.u32 %v2422, 2147483648
    %v2439 = vxor.u32 %v2423, 2147483648
    %v2440 = vxor.u32 %v2424, 2147483648
    %v2441 = vxor.u32 %v2425, 2147483648
    %v2442 = vxor.u32 %v2426, 2147483648
    %v2443 = vxor.u32 %v2427, 2147483648
    %v2444 = vxor.u32 %v2428, 2147483648
    %v2445 = vxor.u32 %v2429, 2147483648
    %v2446 = vxor.u32 %v2430, 2147483648
    %v2447 = vxor.u32 %v2431, 2147483648
    %v2448 = vxor.u32 %v2432, 2147483648
    %v2449 = vmul.f32 %v2433, 1.442695
    %v2450 = vpow.pop %v2449
    %v2451 = vmul.f32 %v2434, 1.442695
    %v2452 = vpow.pop %v2451
    %v2453 = vmul.f32 %v2435, 1.442695
    %v2454 = vpow.pop %v2453
    %v2455 = vmul.f32 %v2436, 1.442695
    %v2456 = vpow.pop %v2455
    %v2457 = vmul.f32 %v2437, 1.442695
    %v2458 = vpow.pop %v2457
    %v2459 = vmul.f32 %v2438, 1.442695
    %v2460 = vpow.pop %v2459
    %v2461 = vmul.f32 %v2439, 1.442695
    %v2462 = vpow.pop %v2461
    %v2463 = vmul.f32 %v2440, 1.442695
    %v2464 = vpow.pop %v2463
    %v2465 = vmul.f32 %v2441, 1.442695
    %v2466 = vpow.pop %v2465
    %v2467 = vmul.f32 %v2442, 1.442695
    %v2468 = vpow.pop %v2467
    %v2469 = vmul.f32 %v2443, 1.442695
    %v2470 = vpow.pop %v2469
    %v2471 = vmul.f32 %v2444, 1.442695
    %v2472 = vpow.pop %v2471
    %v2473 = vmul.f32 %v2445, 1.442695
    %v2474 = vpow.pop %v2473
    %v2475 = vmul.f32 %v2446, 1.442695
    %v2476 = vpow.pop %v2475
    %v2477 = vmul.f32 %v2447, 1.442695
    %v2478 = vpow.pop %v2477
    %v2479 = vmul.f32 %v2448, 1.442695
    %v2480 = vpow.pop %v2479
    %v2481 = vadd.f32 %v2450, 1.0
    %v2482 = vadd.f32 %v2452, 1.0
    %v2483 = vadd.f32 %v2454, 1.0
    %v2484 = vadd.f32 %v2456, 1.0
    %v2485 = vadd.f32 %v2458, 1.0
    %v2486 = vadd.f32 %v2460, 1.0
    %v2487 = vadd.f32 %v2462, 1.0
    %v2488 = vadd.f32 %v2464, 1.0
    %v2489 = vadd.f32 %v2466, 1.0
    %v2490 = vadd.f32 %v2468, 1.0
    %v2491 = vadd.f32 %v2470, 1.0
    %v2492 = vadd.f32 %v2472, 1.0
    %v2493 = vadd.f32 %v2474, 1.0
    %v2494 = vadd.f32 %v2476, 1.0
    %v2495 = vadd.f32 %v2478, 1.0
    %v2496 = vadd.f32 %v2480, 1.0
    %v2497 = vrcp.pop %v2481
    %v2498 = vmul.f32 1.0, %v2497
    %v2499 = vrcp.pop %v2482
    %v2500 = vmul.f32 1.0, %v2499
    %v2501 = vrcp.pop %v2483
    %v2502 = vmul.f32 1.0, %v2501
    %v2503 = vrcp.pop %v2484
    %v2504 = vmul.f32 1.0, %v2503
    %v2505 = vrcp.pop %v2485
    %v2506 = vmul.f32 1.0, %v2505
    %v2507 = vrcp.pop %v2486
    %v2508 = vmul.f32 1.0, %v2507
    %v2509 = vrcp.pop %v2487
    %v2510 = vmul.f32 1.0, %v2509
    %v2511 = vrcp.pop %v2488
    %v2512 = vmul.f32 1.0, %v2511
    %v2513 = vrcp.pop %v2489
    %v2514 = vmul.f32 1.0, %v2513
    %v2515 = vrcp.pop %v2490
    %v2516 = vmul.f32 1.0, %v2515
    %v2517 = vrcp.pop %v2491
    %v2518 = vmul.f32 1.0, %v2517
    %v2519 = vrcp.pop %v2492
    %v2520 = vmul.f32 1.0, %v2519
    %v2521 = vrcp.pop %v2493
    %v2522 = vmul.f32 1.0, %v2521
    %v2523 = vrcp.pop %v2494
    %v2524 = vmul.f32 1.0, %v2523
    %v2525 = vrcp.pop %v2495
    %v2526 = vmul.f32 1.0, %v2525
    %v2527 = vrcp.pop %v2496
    %v2528 = vmul.f32 1.0, %v2527
    %v2531 = vcombine.low %v1131, %v1132
    %v2532 = vcombine.high %v1131, %v1132
    %v2534 = vunpack.c.l.s4 1966171168
    %v2535 = vunpack.c.0.s8 %v2534
    %v2536 = vlaneseq
    %v2537 = vshrl.u32 %v2536, 7
    %v2538 = vsub.s32 %v2535, %v2537
    %v2539 = vrot.slane %v2531, %v2538
    %v2541 = vunpack.c.l.s4 1966171168
    %v2542 = vunpack.c.0.s8 %v2541
    %v2543 = vlaneseq
    %v2544 = vshrl.u32 %v2543, 7
    %v2545 = vsub.s32 %v2542, %v2544
    %v2546 = vrot.slane %v2532, %v2545
    %v2547 = vcombine.high %v2539, %v2539
    %v2548 = vcombine.high %v2546, %v2546
    %v2550 = vunpack.c.l.s4 1966171168
    %v2551 = vunpack.c.0.s8 %v2550
    %v2552 = vlaneseq
    %v2553 = vshrl.u32 %v2552, 7
    %v2554 = vsub.s32 %v2551, %v2553
    %v2555 = vrot.slane %v2539, %v2554
    %v2557 = vunpack.c.l.s4 1966171168
    %v2558 = vunpack.c.0.s8 %v2557
    %v2559 = vlaneseq
    %v2560 = vshrl.u32 %v2559, 7
    %v2561 = vsub.s32 %v2558, %v2560
    %v2562 = vrot.slane %v2546, %v2561
    %v2564 = vunpack.c.l.s4 1966171168
    %v2565 = vunpack.c.0.s8 %v2564
    %v2566 = vlaneseq
    %v2567 = vshrl.u32 %v2566, 7
    %v2568 = vsub.s32 %v2565, %v2567
    %v2569 = vrot.slane %v2547, %v2568
    %v2571 = vunpack.c.l.s4 1966171168
    %v2572 = vunpack.c.0.s8 %v2571
    %v2573 = vlaneseq
    %v2574 = vshrl.u32 %v2573, 7
    %v2575 = vsub.s32 %v2572, %v2574
    %v2576 = vrot.slane %v2548, %v2575
    %v2577 = vcombine.high %v2555, %v2555
    %v2578 = vcombine.high %v2562, %v2562
    %v2579 = vcombine.high %v2569, %v2569
    %v2580 = vcombine.high %v2576, %v2576
    %v2581 = vlaneseq
    %v2582 = vshrl.u32 %v2581, 7
    %v2583 = vsub.s32 0, %v2582
    %v2584 = vrot.slane %v2555, %v2583
    %v2585 = vlaneseq
    %v2586 = vshrl.u32 %v2585, 7
    %v2587 = vsub.s32 1, %v2586
    %v2588 = vrot.slane %v2555, %v2587
    %v2589 = vlaneseq
    %v2590 = vshrl.u32 %v2589, 7
    %v2591 = vsub.s32 0, %v2590
    %v2592 = vrot.slane %v2569, %v2591
    %v2593 = vlaneseq
    %v2594 = vshrl.u32 %v2593, 7
    %v2595 = vsub.s32 1, %v2594
    %v2596 = vrot.slane %v2569, %v2595
    %v2597 = vlaneseq
    %v2598 = vshrl.u32 %v2597, 7
    %v2599 = vsub.s32 0, %v2598
    %v2600 = vrot.slane %v2577, %v2599
    %v2601 = vlaneseq
    %v2602 = vshrl.u32 %v2601, 7
    %v2603 = vsub.s32 1, %v2602
    %v2604 = vrot.slane %v2577, %v2603
    %v2605 = vlaneseq
    %v2606 = vshrl.u32 %v2605, 7
    %v2607 = vsub.s32 0, %v2606
    %v2608 = vrot.slane %v2579, %v2607
    %v2609 = vlaneseq
    %v2610 = vshrl.u32 %v2609, 7
    %v2611 = vsub.s32 1, %v2610
    %v2612 = vrot.slane %v2579, %v2611
    %v2613 = vlaneseq
    %v2614 = vshrl.u32 %v2613, 7
    %v2615 = vsub.s32 0, %v2614
    %v2616 = vrot.slane %v2562, %v2615
    %v2617 = vlaneseq
    %v2618 = vshrl.u32 %v2617, 7
    %v2619 = vsub.s32 1, %v2618
    %v2620 = vrot.slane %v2562, %v2619
    %v2621 = vlaneseq
    %v2622 = vshrl.u32 %v2621, 7
    %v2623 = vsub.s32 0, %v2622
    %v2624 = vrot.slane %v2576, %v2623
    %v2625 = vlaneseq
    %v2626 = vshrl.u32 %v2625, 7
    %v2627 = vsub.s32 1, %v2626
    %v2628 = vrot.slane %v2576, %v2627
    %v2629 = vlaneseq
    %v2630 = vshrl.u32 %v2629, 7
    %v2631 = vsub.s32 0, %v2630
    %v2632 = vrot.slane %v2578, %v2631
    %v2633 = vlaneseq
    %v2634 = vshrl.u32 %v2633, 7
    %v2635 = vsub.s32 1, %v2634
    %v2636 = vrot.slane %v2578, %v2635
    %v2637 = vlaneseq
    %v2638 = vshrl.u32 %v2637, 7
    %v2639 = vsub.s32 0, %v2638
    %v2640 = vrot.slane %v2580, %v2639
    %v2641 = vlaneseq
    %v2642 = vshrl.u32 %v2641, 7
    %v2643 = vsub.s32 1, %v2642
    %v2644 = vrot.slane %v2580, %v2643
    %v2661 = vmul.f32 %v2498, %v2584
    %v2662 = vmul.f32 %v2500, %v2588
    %v2663 = vmul.f32 %v2502, %v2592
    %v2664 = vmul.f32 %v2504, %v2596
    %v2665 = vmul.f32 %v2506, %v2600
    %v2666 = vmul.f32 %v2508, %v2604
    %v2667 = vmul.f32 %v2510, %v2608
    %v2668 = vmul.f32 %v2512, %v2612
    %v2669 = vmul.f32 %v2514, %v2616
    %v2670 = vmul.f32 %v2516, %v2620
    %v2671 = vmul.f32 %v2518, %v2624
    %v2672 = vmul.f32 %v2520, %v2628
    %v2673 = vmul.f32 %v2522, %v2632
    %v2674 = vmul.f32 %v2524, %v2636
    %v2675 = vmul.f32 %v2526, %v2640
    %v2676 = vmul.f32 %v2528, %v2644
    %v2677 = vadd.f32 %v2661, %v2663
    %v2678 = vadd.f32 %v2677, %v2665
    %v2679 = vadd.f32 %v2678, %v2667
    %v2680 = vadd.f32 %v2679, %v2669
    %v2681 = vadd.f32 %v2680, %v2671
    %v2682 = vadd.f32 %v2681, %v2673
    %v2683 = vadd.f32 %v2682, %v2675
    %v2684 = vadd.f32 %v2662, %v2664
    %v2685 = vadd.f32 %v2684, %v2666
    %v2686 = vadd.f32 %v2685, %v2668
    %v2687 = vadd.f32 %v2686, %v2670
    %v2688 = vadd.f32 %v2687, %v2672
    %v2689 = vadd.f32 %v2688, %v2674
    %v2690 = vadd.f32 %v2689, %v2676
    %v2691 = vadd.f32 %v2301, %v2683
    %v2692 = vadd.f32 %v2302, %v2690
    %v2693 = vld [vmem:[%s3] sm:$0x3]
    %v2695 = vlaneseq
    %v2696 = vshrl.u32 %v2695, 7
    %v2697 = vsub.s32 0, %v2696
    %v2698 = vrot.slane %v2693, %v2697
    %v2699 = vlaneseq
    %v2700 = vshrl.u32 %v2699, 7
    %v2701 = vsub.s32 1, %v2700
    %v2702 = vrot.slane %v2693, %v2701
    %v2705 = vadd.f32 %v2691, %v2698
    %v2706 = vadd.f32 %v2692, %v2702
    %v2707 = vxor.u32 %v2705, 2147483648
    %v2708 = vxor.u32 %v2706, 2147483648
    %v2709 = vmul.f32 %v2707, 1.442695
    %v2710 = vpow.pop %v2709
    %v2711 = vmul.f32 %v2708, 1.442695
    %v2712 = vpow.pop %v2711
    %v2713 = vadd.f32 %v2710, 1.0
    %v2714 = vadd.f32 %v2712, 1.0
    %v2715 = vrcp.pop %v2713
    %v2716 = vmul.f32 1.0, %v2715
    %v2717 = vrcp.pop %v2714
    %v2718 = vmul.f32 1.0, %v2717
    %2719 = vst [vmem:[%s5] sm:$0xff] %v2716
    %2720 = vst [vmem:[%s5 + $0x8] sm:$0xff] %v2718
    // Predicated region
    $region26: #{nade_forward.1} parent=1 // pred_check
      _
    $region27: #{nade_forward.1} parent=1 // pred_check_branch
      %2722 = sbr.rel (0) target = $region29
    $region28: #{nade_forward.1} parent=1 // pred_region
      _
    $region29: #{nade_forward.1} parent=1 // pred_fallthru
      _
    // Predicated region
    $region30: #{nade_forward.1} parent=1 // pred_check
      _
    $region31: #{nade_forward.1} parent=1 // pred_check_branch
      %2724 = sbr.rel (0) target = $region33
    $region32: #{nade_forward.1} parent=1 // pred_region
      _
    $region33: #{nade_forward.1} parent=1 // pred_fallthru
      _
    %2725 = vsyncpa [#allocation3], 1

</llo_original>
